<compile_context>
chip_gen: v7x
topology: tpu7x:2x2x1
jax: 0.10.0
libtpu: 0.0.40
codegen_flags: <defaults>
</compile_context>

<pallas_src>
import functools

import jax
import jax.numpy as jnp
import numpy as np
from jax.experimental import pallas as pl
from jax.experimental.pallas import tpu as pltpu

K = 3          # ConvTranspose kernel size
STRIDE = 2     # ConvTranspose stride
LANE = 128
SUBLANE = 16   # bf16 sublane packing


def _round_up(x, m):
    return (x + m - 1) // m * m


def _cdiv(a, b):
    return (a + b - 1) // b


def convt_phase_kernel(x_ref, w_ref, b_ref, o_ref, *scratch,
                       c_in_p, w_pitch, tile_rows, fuse_taps):
    """One (batch, row-tile) grid step.

    x_ref : (C_in_p, (TR+2)*W_PITCH)   bf16 padded-input rows [r0, r0+TR+1],
                                       flattened with a 128-aligned row pitch.
    w_ref : (C_out4_p, 4*C_in_p)       bf16 phase/tap-fused weight slab.
    b_ref : (C_out4_p, 1)              f32 bias (tiled per phase).
    o_ref : (C_out4_p, TR*W_PITCH)     f32 phase-separated output rows.
    scratch (fused path only): (4*C_in_p, TR*W_PITCH) bf16 tap stack.
    """
    s_t = tile_rows * w_pitch
    # 2x2 tap views: row +1 is a +w_pitch lane offset (lane-aligned since
    # w_pitch % 128 == 0); col +1 is a +1 lane offset.  The +1 views read one
    # lane into the halo region, which only ever lands in phase-grid columns
    # that the caller drops.
    shifts = (0, 1, w_pitch, w_pitch + 1)

    if fuse_taps:
        # Small C_in: fuse all taps into one matmul of contraction depth 4*C_in_p.
        xs_ref, = scratch
        for t, s in enumerate(shifts):
            xs_ref[t * c_in_p:(t + 1) * c_in_p, :] = x_ref[:, s:s + s_t]
        acc = jnp.dot(w_ref[...], xs_ref[...],
                      preferred_element_type=jnp.float32)
    else:
        # Production C_in: 4 accumulated matmuls, no im2col scratch traffic.
        acc = jnp.dot(w_ref[:, 0:c_in_p], x_ref[:, 0:s_t],
                      preferred_element_type=jnp.float32)
        for t in range(1, 4):
            s = shifts[t]
            acc += jnp.dot(w_ref[:, t * c_in_p:(t + 1) * c_in_p],
                           x_ref[:, s:s + s_t],
                           preferred_element_type=jnp.float32)

    o_ref[...] = (acc + b_ref[...]).astype(o_ref.dtype)


def _build_weight_slab(w, c_in_p, c_out4_p):
    """w: (C_in, C_out, 3, 3) ConvTranspose2d weight -> (C_out4_p, 4*C_in_p) bf16.

    Row block order: phase (pr, pc) = output (row, col) parity.
    Col block order: tap (dy, dx) over the 2x2 window of the 1-padded input,
    each tap block zero-padded to C_in_p columns.
    """
    c_in, c_out = w.shape[0], w.shape[1]

    def tap_to_k(parity, d):
        # even output coord: kernel taps k=0 (from input offset d=1) and k=2 (d=0)
        # odd  output coord: only k=1 (d=1)
        if parity == 0:
            return 0 if d == 1 else 2
        return 1 if d == 1 else None

    rows = []
    for pr in range(2):
        for pc in range(2):
            cols = []
            for dy in range(2):
                for dx in range(2):
                    kh, kw = tap_to_k(pr, dy), tap_to_k(pc, dx)
                    blk = jnp.zeros((c_out, c_in_p), jnp.float32)
                    if kh is not None and kw is not None:
                        blk = blk.at[:, :c_in].set(
                            w[:, :, kh, kw].T.astype(jnp.float32))
                    cols.append(blk)
            rows.append(jnp.concatenate(cols, axis=1))        # (C_out, 4*C_in_p)
    slab = jnp.concatenate(rows, axis=0)                       # (4*C_out, 4*C_in_p)
    slab = jnp.pad(slab, ((0, c_out4_p - 4 * c_out), (0, 0)))
    return slab.astype(jnp.bfloat16)


def _pick_tile_rows(n_rows, w_pitch, c_in_p, c_out4_p, fuse_taps):
    """Largest row tile whose double-buffered per-step footprint fits every TPU
    generation (~24 MiB budget leaves headroom inside v7x's 64 MiB and the v5e
    scoped limit), preferring >=2 row tiles so the pipeline/megacore has steps."""
    budget = 24 * 2**20
    candidates = (32, 16, 8)
    for tr in candidates:
        per_step = (2 * (c_in_p * (tr + 2) * w_pitch * 2        # bf16 input blk
                         + c_out4_p * tr * w_pitch * 4)         # f32 output blk
                    + (4 * c_in_p * tr * w_pitch * 2 if fuse_taps else 0))
        if per_step <= budget and (_cdiv(n_rows, tr) >= 2 or tr == candidates[-1]):
            return tr
    return candidates[-1]


def conv_transpose_phases(x_nchw, w, b, *, tile_rows=None):
    """ConvTranspose2d(k=3, s=2, p=0) + bias via phase decomposition.

    Returns (N, C_out4_p, R_pad, W_PITCH) f32: phase-separated output over the
    padded phase grid.  Rows >= H+1, cols >= W+1 and channels >= 4*C_out are
    padding/garbage and are dropped by the caller.
    """
    N, c_in, H, W = x_nchw.shape
    c_out = w.shape[1]

    c_in_p = _round_up(c_in, SUBLANE)
    c_out4_p = _round_up(4 * c_out, SUBLANE)
    w_pitch = _round_up(W + 2, LANE)           # 128-aligned padded row pitch
    n_rows = H + 1                             # valid phase-grid rows

    fuse_taps = c_in_p < 128                   # fused im2col only for small C_in
    if tile_rows is None:
        tile_rows = _pick_tile_rows(n_rows, w_pitch, c_in_p, c_out4_p, fuse_taps)
    num_tiles = _cdiv(n_rows, tile_rows)
    r_in = num_tiles * tile_rows + 2           # padded rows incl. halo + slack
    s_t = tile_rows * w_pitch                  # output lanes per grid step
    s_in_t = (tile_rows + 2) * w_pitch         # input lanes per grid step

    # Glue: cast to bf16, zero-pad the 1-px border (+ alignment), build row
    # tiles with the halo materialized (one bf16 copy of the input in HBM).
    # TODO(synk): replace with in-kernel padding + manual DMA (pl.ANY) to drop
    # this extra HBM round trip of the input entirely.
    x_pad = jnp.pad(x_nchw.astype(jnp.bfloat16),
                    ((0, 0), (0, c_in_p - c_in),
                     (1, r_in - 1 - H), (1, w_pitch - 1 - W)))
    x_tiles = jnp.stack(
        [x_pad[:, :, j * tile_rows:j * tile_rows + tile_rows + 2, :]
         for j in range(num_tiles)], axis=1)
    x_tiles = x_tiles.reshape(N, num_tiles, c_in_p, s_in_t)

    w_slab = _build_weight_slab(w, c_in_p, c_out4_p)              # bf16
    b_col = jnp.zeros((c_out4_p,), jnp.float32).at[:4 * c_out].set(
        jnp.tile(b.astype(jnp.float32), 4)).reshape(c_out4_p, 1)

    kernel = functools.partial(convt_phase_kernel, c_in_p=c_in_p,
                               w_pitch=w_pitch, tile_rows=tile_rows,
                               fuse_taps=fuse_taps)

    # Explicit VMEM budget: double-buffered in/out blocks + resident weights
    # (+ tap scratch on the fused path), with 2x headroom, capped for v7x.
    est = (2 * (c_in_p * s_in_t * 2 + c_out4_p * s_t * 4)
           + c_out4_p * 4 * c_in_p * 2 + c_out4_p * 4
           + (4 * c_in_p * s_t * 2 if fuse_taps else 0))
    vmem_limit = int(min(48 * 2**20, max(32 * 2**20, 2 * est)))

    scratch_shapes = ([pltpu.VMEM((4 * c_in_p, s_t), jnp.bfloat16)]
                      if fuse_taps else [])

    out_flat = pl.pallas_call(
        kernel,
        out_shape=jax.ShapeDtypeStruct((N, c_out4_p, num_tiles * s_t),
                                       jnp.float32),
        grid=(N, num_tiles),
        in_specs=[
            pl.BlockSpec((None, None, c_in_p, s_in_t), lambda n, j: (n, j, 0, 0)),
            pl.BlockSpec((c_out4_p, 4 * c_in_p), lambda n, j: (0, 0)),
            pl.BlockSpec((c_out4_p, 1), lambda n, j: (0, 0)),
        ],
        out_specs=pl.BlockSpec((None, c_out4_p, s_t), lambda n, j: (n, 0, j)),
        scratch_shapes=scratch_shapes,
        compiler_params=pltpu.CompilerParams(
            dimension_semantics=("parallel", "parallel"),
            vmem_limit_bytes=vmem_limit),
    )(x_tiles, w_slab, b_col)

    return out_flat.reshape(N, c_out4_p, num_tiles * tile_rows, w_pitch)


def transition_up(x, skip, w, b):
    """x, skip: NCHW. Returns concat([center_crop(convT(x)), skip], channel)."""
    N, c_in, H, W = x.shape
    c_out = w.shape[1]
    Hs, Ws = skip.shape[2], skip.shape[3]
    H_out, W_out = STRIDE * H + 1, STRIDE * W + 1
    if Hs > H_out or Ws > W_out:
        raise ValueError("center_crop expects skip spatial dims <= ConvT output "
                         f"dims, got skip=({Hs},{Ws}) vs conv=({H_out},{W_out})")

    out_grid = conv_transpose_phases(x, w, b)      # (N, C_out4_p, R_pad, W_PITCH)

    # Glue: drop channel/row/col padding, interleave the 4 phases, crop, concat.
    ph = out_grid[:, :4 * c_out, :H + 1, :W + 1].reshape(
        N, 2, 2, c_out, H + 1, W + 1)
    full = jnp.transpose(ph, (0, 3, 4, 1, 5, 2)).reshape(
        N, c_out, 2 * (H + 1), 2 * (W + 1))        # rows/cols 0..2H+1 / 0..2W+1
    xy1 = (W_out - Ws) // 2
    xy2 = (H_out - Hs) // 2
    out = full[:, :, xy2:xy2 + Hs, xy1:xy1 + Ws]
    return jnp.concatenate([out, skip.astype(out.dtype)], axis=1)


def ref_transition_up(x, skip, w, b):
    """Pure-JAX f32 reference using the direct ConvTranspose2d formula."""
    N, c_in, H, W = x.shape
    c_out = w.shape[1]
    H_out, W_out = STRIDE * H + 1, STRIDE * W + 1
    out = jnp.zeros((N, c_out, H_out, W_out), jnp.float32)
    for kh in range(K):
        for kw in range(K):
            contrib = jnp.einsum('nchw,cd->ndhw', x, w[:, :, kh, kw])
            out = out.at[:, :, kh:kh + STRIDE * H:STRIDE,
                         kw:kw + STRIDE * W:STRIDE].add(contrib)
    out = out + b[None, :, None, None]
    Hs, Ws = skip.shape[2], skip.shape[3]
    xy1 = (W_out - Ws) // 2
    xy2 = (H_out - Hs) // 2
    out = out[:, :, xy2:xy2 + Hs, xy1:xy1 + Ws]
    return jnp.concatenate([out, skip.astype(out.dtype)], axis=1)


if __name__ == "__main__":
    key = jax.random.PRNGKey(0)
    k1, k2, k3, k4 = jax.random.split(key, 4)

    N, C_in, H, W = 2, 4, 16, 16
    C_out = 5
    C_skip, Hs, Ws = 6, 32, 32          # convT out is 33x33 -> cropped to 32x32

    x = jax.random.normal(k1, (N, C_in, H, W), dtype=jnp.float32)
    skip = jax.random.normal(k2, (N, C_skip, Hs, Ws), dtype=jnp.float32)
    # ConvTranspose2d params: weight (in_channels, out_channels, kH, kW), bias (out_channels,)
    w = 0.1 * jax.random.normal(k3, (C_in, C_out, K, K), dtype=jnp.float32)
    b = 0.1 * jax.random.normal(k4, (C_out,), dtype=jnp.float32)

    out = jax.block_until_ready(transition_up(x, skip, w, b))
    ref = jax.block_until_ready(ref_transition_up(x, skip, w, b))

    assert out.shape == (N, C_out + C_skip, Hs, Ws), out.shape
    # bf16 MXU operands with f32 accumulation -> looser tolerance than pure f32.
    np.testing.assert_allclose(np.asarray(out), np.asarray(ref),
                               rtol=2e-2, atol=2e-2)
    print("KERNEL_OK")
</pallas_src>

<mosaic_0001>
module attributes {stable_mosaic.version = 11 : i64} {
  func.func @convt_phase_kernel(%arg0: i32, %arg1: i32, %arg2: memref<1x1x16x2304xbf16, #tpu.memory_space<vmem>>, %arg3: memref<32x64xbf16, #tpu.memory_space<vmem>>, %arg4: memref<32x1xf32, #tpu.memory_space<vmem>>, %arg5: memref<1x32x2048xf32, #tpu.memory_space<vmem>>, %arg6: memref<64x2048xbf16, #tpu.memory_space<vmem>>) attributes {dimension_semantics = [#tpu.dimension_semantics<parallel>, #tpu.dimension_semantics<parallel>], iteration_bounds = array<i64: 2, 2>, scalar_prefetch = 0 : i64, scratch_operands = 1 : i64, tpu.core_type = #tpu.core_type<tc>, window_params = [{transform_indices = @transform_0, window_bounds = array<i64: 1, 1, 16, 2304>}, {pipeline_mode = #tpu.pipeline_mode<synchronous>, transform_indices = @transform_1, window_bounds = array<i64: 32, 64>}, {pipeline_mode = #tpu.pipeline_mode<synchronous>, transform_indices = @transform_2, window_bounds = array<i64: 32, 1>}, {transform_indices = @transform_3, window_bounds = array<i64: 1, 32, 2048>}]} {
    %c0 = arith.constant 0 : index
    %c0_0 = arith.constant 0 : index
    %c0_1 = arith.constant 0 : index
    %c0_2 = arith.constant 0 : index
    %0 = vector.load %arg2[%c0, %c0_0, %c0_1, %c0_2] : memref<1x1x16x2304xbf16, #tpu.memory_space<vmem>>, vector<1x1x16x2048xbf16>
    %1 = vector.shape_cast %0 : vector<1x1x16x2048xbf16> to vector<16x2048xbf16>
    %c0_3 = arith.constant 0 : index
    %c0_4 = arith.constant 0 : index
    %2 = vector.load %arg6[%c0_3, %c0_4] : memref<64x2048xbf16, #tpu.memory_space<vmem>>, vector<16x2048xbf16>
    tpu.vector_store %arg6[%c0_3, %c0_4], %1 {strides = array<i32>} : memref<64x2048xbf16, #tpu.memory_space<vmem>>, vector<16x2048xbf16>,
    %c0_5 = arith.constant 0 : index
    %c0_6 = arith.constant 0 : index
    %c0_7 = arith.constant 0 : index
    %c1 = arith.constant 1 : index
    %3 = vector.load %arg2[%c0_5, %c0_6, %c0_7, %c1] : memref<1x1x16x2304xbf16, #tpu.memory_space<vmem>>, vector<1x1x16x2048xbf16>
    %4 = vector.shape_cast %3 : vector<1x1x16x2048xbf16> to vector<16x2048xbf16>
    %c16 = arith.constant 16 : index
    %c0_8 = arith.constant 0 : index
    %5 = vector.load %arg6[%c16, %c0_8] : memref<64x2048xbf16, #tpu.memory_space<vmem>>, vector<16x2048xbf16>
    tpu.vector_store %arg6[%c16, %c0_8], %4 {strides = array<i32>} : memref<64x2048xbf16, #tpu.memory_space<vmem>>, vector<16x2048xbf16>,
    %c0_9 = arith.constant 0 : index
    %c0_10 = arith.constant 0 : index
    %c0_11 = arith.constant 0 : index
    %c128 = arith.constant 128 : index
    %6 = vector.load %arg2[%c0_9, %c0_10, %c0_11, %c128] : memref<1x1x16x2304xbf16, #tpu.memory_space<vmem>>, vector<1x1x16x2048xbf16>
    %7 = vector.shape_cast %6 : vector<1x1x16x2048xbf16> to vector<16x2048xbf16>
    %c32 = arith.constant 32 : index
    %c0_12 = arith.constant 0 : index
    %8 = vector.load %arg6[%c32, %c0_12] : memref<64x2048xbf16, #tpu.memory_space<vmem>>, vector<16x2048xbf16>
    tpu.vector_store %arg6[%c32, %c0_12], %7 {strides = array<i32>} : memref<64x2048xbf16, #tpu.memory_space<vmem>>, vector<16x2048xbf16>,
    %c0_13 = arith.constant 0 : index
    %c0_14 = arith.constant 0 : index
    %c0_15 = arith.constant 0 : index
    %c129 = arith.constant 129 : index
    %9 = vector.load %arg2[%c0_13, %c0_14, %c0_15, %c129] : memref<1x1x16x2304xbf16, #tpu.memory_space<vmem>>, vector<1x1x16x2048xbf16>
    %10 = vector.shape_cast %9 : vector<1x1x16x2048xbf16> to vector<16x2048xbf16>
    %c48 = arith.constant 48 : index
    %c0_16 = arith.constant 0 : index
    %11 = vector.load %arg6[%c48, %c0_16] : memref<64x2048xbf16, #tpu.memory_space<vmem>>, vector<16x2048xbf16>
    tpu.vector_store %arg6[%c48, %c0_16], %10 {strides = array<i32>} : memref<64x2048xbf16, #tpu.memory_space<vmem>>, vector<16x2048xbf16>,
    %c0_17 = arith.constant 0 : index
    %c0_18 = arith.constant 0 : index
    %12 = vector.load %arg3[%c0_17, %c0_18] : memref<32x64xbf16, #tpu.memory_space<vmem>>, vector<32x64xbf16>
    %c0_19 = arith.constant 0 : index
    %c0_20 = arith.constant 0 : index
    %13 = vector.load %arg6[%c0_19, %c0_20] : memref<64x2048xbf16, #tpu.memory_space<vmem>>, vector<64x2048xbf16>
    %cst = arith.constant dense<0.000000e+00> : vector<32x2048xf32>
    %14 = tpu.matmul %12, %13, %cst {dimension_numbers = #tpu.dot_dimension_numbers<[1], [0], [0], [1], [0, 0, 1, 1], [], []>} : vector<32x64xbf16>, vector<64x2048xbf16>, vector<32x2048xf32> -> vector<32x2048xf32>
    %c0_21 = arith.constant 0 : index
    %c0_22 = arith.constant 0 : index
    %15 = vector.load %arg4[%c0_21, %c0_22] : memref<32x1xf32, #tpu.memory_space<vmem>>, vector<32x1xf32>
    %16 = vector.broadcast %15 : vector<32x1xf32> to vector<32x2048xf32>
    %17 = arith.addf %14, %16 : vector<32x2048xf32>
    %c0_23 = arith.constant 0 : index
    %c0_24 = arith.constant 0 : index
    %c0_25 = arith.constant 0 : index
    %18 = vector.load %arg5[%c0_23, %c0_24, %c0_25] : memref<1x32x2048xf32, #tpu.memory_space<vmem>>, vector<1x32x2048xf32>
    %19 = vector.shape_cast %18 : vector<1x32x2048xf32> to vector<32x2048xf32>
    %20 = vector.shape_cast %17 : vector<32x2048xf32> to vector<1x32x2048xf32>
    tpu.vector_store %arg5[%c0_23, %c0_24, %c0_25], %20 {strides = array<i32>} : memref<1x32x2048xf32, #tpu.memory_space<vmem>>, vector<1x32x2048xf32>,
    return
  }
  func.func @transform_0(%arg0: i32, %arg1: i32) -> (i32, i32, i32, i32) {
    %c0_i32 = arith.constant 0 : i32
    %c0_i32_0 = arith.constant 0 : i32
    %c0_i32_1 = arith.constant 0 : i32
    return %arg0, %arg1, %c0_i32, %c0_i32_0 : i32, i32, i32, i32
  }
  func.func @transform_1(%arg0: i32, %arg1: i32) -> (i32, i32) {
    %c0_i32 = arith.constant 0 : i32
    %c0_i32_0 = arith.constant 0 : i32
    %c0_i32_1 = arith.constant 0 : i32
    return %c0_i32, %c0_i32_0 : i32, i32
  }
  func.func @transform_2(%arg0: i32, %arg1: i32) -> (i32, i32) {
    %c0_i32 = arith.constant 0 : i32
    %c0_i32_0 = arith.constant 0 : i32
    %c0_i32_1 = arith.constant 0 : i32
    return %c0_i32, %c0_i32_0 : i32, i32
  }
  func.func @transform_3(%arg0: i32, %arg1: i32) -> (i32, i32, i32) {
    %c0_i32 = arith.constant 0 : i32
    %c0_i32_0 = arith.constant 0 : i32
    return %arg0, %c0_i32, %arg1 : i32, i32, i32
  }
}

</mosaic_0001>

<llo_original>
// kernel: tpu_custom_call.1
$region0: #{tpu_custom_call.1}
  #allocation0 [shape = 'u32[]', space=smem, size = 0x4, offset = 0x4, fixed_abs, tag = 'smem constant byte address 0x4 - core index']
  #allocation1 [shape = 'u32[144,128]{1,0:T(1,128)}', space=vmem, size = 0x12000, scoped, tag = 'internal scratch']
  #allocation2 [shape = 'bf16[64,2048]{1,0:T(16,128)(2,1)}', space=vmem, size = 0x40000, scoped, tag = 'scratch operand']
  %s0 = inlined_call_operand.hbm [shape: bf16[2,2,16,2304], index: 0, kind: input, shape index: {}]
  %s1 = inlined_call_operand.vmem [shape: bf16[32,64], index: 1, kind: input, shape index: {}]
  %s2 = inlined_call_operand.vmem [shape: f32[32,1], index: 2, kind: input, shape index: {}]
  %s3 = inlined_call_operand.hbm [shape: f32[2,32,4096], index: 3, kind: output, shape index: {}]
  %s4 = sld [smem:[#allocation0]]
  $region49: #{tpu_custom_call.1} parent=0
    _
  %s6 = ssub.s32 1, %s4
  %s7 = scalar_select 0, %s6, %s4
  $region1: #{tpu_custom_call.1} parent=0
    #allocation3 [shape = 'u8[147456]{0}', space=vmem, size = 0x24000, scoped, tag = 'input window, operand 0']
    #allocation4 [shape = 's32[2]{0}', space=sflag, size = 0x8, scoped, tag = 'scoped memory for tpu_custom_call.1']
    #allocation5 [shape = 's32[2]{0}', space=sflag, size = 0x8, scoped, tag = 'scoped memory for tpu_custom_call.1']
    #allocation6 [shape = 'u8[524288]{0}', space=vmem, size = 0x80000, scoped, tag = 'output window, operand 0']
    %8 = vsyncpa [#allocation4], 0
    %s9 = scalar_lea.sflag [#allocation4], 1
    %10 = vsyncpa %s9, 0
    %11 = vsyncpa [#allocation5], 0
    %s12 = scalar_lea.sflag [#allocation5], 1
    %13 = vsyncpa %s12, 0
    loop: start=0, step=1, limit=6
    $region2: #{tpu_custom_call.1} parent=1 // loop_pre_header
      _
    $region3: #{tpu_custom_call.1} parent=1 // loop_header
      %s15 = sphi 0, %s19
      %p16 = scmp.ge.s32.totalorder %s15, 6
      %s22 = sphi 0, %s34
      %s23 = sphi 0, %s30
      %s24 = sphi 0, %s22
      %s25 = sphi 0, %s23
      %s26 = sphi 0, %s24
      %s27 = sphi 0, %s25
      %s39 = sphi 0, %s41
      %s42 = sphi 0, %s39
      %s43 = sphi 0, %s42
      %s59 = sphi 0, %s43
      %s63 = sphi 0, %s63
      %s65 = sphi 0, %s63
      %s66 = sphi 0, %s65
      %s80 = sphi 0, %s66
      %s84 = sphi 0, %s84
      %s86 = sphi 0, %s84
      %s87 = sphi 0, %s86
      %s101 = sphi 0, %s87
      %s109 = sphi 0, %s111
      %s112 = sphi 0, %s109
      %s113 = sphi 0, %s112
      %s129 = sphi 0, %s113
    $region4: #{tpu_custom_call.1} parent=1 // loop_header_branch
      %18 = sbr.rel (%p16) target = $region8
    $region5: #{tpu_custom_call.1} parent=1 // loop_body
      %s20 = ssub.s32 %s15, 1
      %s21 = ssub.s32 %s15, 2
      %s28 = sadd.s32 1, %s23
      %p29 = scmp.ge.s32.totalorder %s28, 2
      %s30 = scalar_select %p29, 0, %s28
      %s31 = sadd.s32 1, %s22
      %s32 = scalar_select %p29, %s31, %s22
      %p33 = scmp.ge.s32.totalorder %s32, 2
      %s34 = scalar_select %p33, 0, %s32
      %s35 = ssub.s32 %s22, %s34
      %s36 = ssub.s32 %s23, %s30
      %s37 = sor.u32 %s35, %s36
      %p38 = scmp.eq.s32.totalorder %s37, 0
      %s40 = sadd.s32 %s39, 1
      %s41 = scalar_select %p38, %s39, %s40
      %p44 = pneg %p38
      %p45 = scmp.eq.s32.totalorder %s15, 3
      %p46 = por %p44, %p45
      %p47 = scmp.ne.s32.totalorder %s39, %s42
      %p48 = scmp.eq.s32.totalorder %s15, 0
      %p49 = por %p47, %p48
      %p50 = scmp.ne.s32.totalorder %s39, %s42
      %p51 = scmp.eq.s32.totalorder %s20, 3
      %p52 = por %p50, %p51
      %p53 = scmp.ne.s32.totalorder %s42, %s43
      %p54 = scmp.eq.s32.totalorder %s20, 0
      %p55 = por %p53, %p54
      %p56 = scmp.ne.s32.totalorder %s42, %s43
      %p57 = scmp.eq.s32.totalorder %s21, 3
      %p58 = por %p56, %p57
      %p60 = scmp.ne.s32.totalorder %s43, %s59
      %p61 = scmp.eq.s32.totalorder %s21, 0
      %p62 = por %p60, %p61
      %s64 = sadd.s32 %s63, 1
      %p67 = scmp.eq.s32.totalorder %s15, 3
      %p68 = scmp.ne.s32.totalorder %s63, %s65
      %p69 = scmp.eq.s32.totalorder %s15, 0
      %p70 = por %p68, %p69
      %p71 = scmp.ne.s32.totalorder %s63, %s65
      %p72 = scmp.eq.s32.totalorder %s20, 3
      %p73 = por %p71, %p72
      %p74 = scmp.ne.s32.totalorder %s65, %s66
      %p75 = scmp.eq.s32.totalorder %s20, 0
      %p76 = por %p74, %p75
      %p77 = scmp.ne.s32.totalorder %s65, %s66
      %p78 = scmp.eq.s32.totalorder %s21, 3
      %p79 = por %p77, %p78
      %p81 = scmp.ne.s32.totalorder %s66, %s80
      %p82 = scmp.eq.s32.totalorder %s21, 0
      %p83 = por %p81, %p82
      %s85 = sadd.s32 %s84, 1
      %p88 = scmp.eq.s32.totalorder %s15, 3
      %p89 = scmp.ne.s32.totalorder %s84, %s86
      %p90 = scmp.eq.s32.totalorder %s15, 0
      %p91 = por %p89, %p90
      %p92 = scmp.ne.s32.totalorder %s84, %s86
      %p93 = scmp.eq.s32.totalorder %s20, 3
      %p94 = por %p92, %p93
      %p95 = scmp.ne.s32.totalorder %s86, %s87
      %p96 = scmp.eq.s32.totalorder %s20, 0
      %p97 = por %p95, %p96
      %p98 = scmp.ne.s32.totalorder %s86, %s87
      %p99 = scmp.eq.s32.totalorder %s21, 3
      %p100 = por %p98, %p99
      %p102 = scmp.ne.s32.totalorder %s87, %s101
      %p103 = scmp.eq.s32.totalorder %s21, 0
      %p104 = por %p102, %p103
      %s105 = ssub.s32 %s22, %s34
      %s106 = ssub.s32 %s23, %s30
      %s107 = sor.u32 %s105, %s106
      %p108 = scmp.eq.s32.totalorder %s107, 0
      %s110 = sadd.s32 %s109, 1
      %s111 = scalar_select %p108, %s109, %s110
      %p114 = pneg %p108
      %p115 = scmp.eq.s32.totalorder %s15, 3
      %p116 = por %p114, %p115
      %p117 = scmp.ne.s32.totalorder %s109, %s112
      %p118 = scmp.eq.s32.totalorder %s15, 0
      %p119 = por %p117, %p118
      %p120 = scmp.ne.s32.totalorder %s109, %s112
      %p121 = scmp.eq.s32.totalorder %s20, 3
      %p122 = por %p120, %p121
      %p123 = scmp.ne.s32.totalorder %s112, %s113
      %p124 = scmp.eq.s32.totalorder %s20, 0
      %p125 = por %p123, %p124
      %p126 = scmp.ne.s32.totalorder %s112, %s113
      %p127 = scmp.eq.s32.totalorder %s21, 3
      %p128 = por %p126, %p127
      %p130 = scmp.ne.s32.totalorder %s113, %s129
      %p131 = scmp.eq.s32.totalorder %s21, 0
      %p132 = por %p130, %p131
      %p133 = scmp.le.s32.totalorder 1, %s15
      %p134 = scmp.lt.s32.totalorder %s15, 5
      %p135 = pnand %p133, %p134
      %p136 = pneg %p135
      // Predicated region
      $region9: #{tpu_custom_call.1} parent=5 // pred_check
        _
      $region10: #{tpu_custom_call.1} parent=5 // pred_check_branch
        %138 = sbr.rel (%p135) target = $region12
      $region11: #{tpu_custom_call.1} parent=5 // pred_region
        %s139 = ssub.s32 %s15, 1
        // Predicated region
        $region13: #{tpu_custom_call.1} parent=11 // pred_check
          %p140 = pneg %p76
        $region14: #{tpu_custom_call.1} parent=11 // pred_check_branch
          %142 = sbr.rel (%p140) target = $region16
        $region15: #{tpu_custom_call.1} parent=11 // pred_region
          _
        $region16: #{tpu_custom_call.1} parent=11 // pred_fallthru
          _
        // Predicated region
        $region17: #{tpu_custom_call.1} parent=11 // pred_check
          %p143 = pneg %p97
        $region18: #{tpu_custom_call.1} parent=11 // pred_check_branch
          %145 = sbr.rel (%p143) target = $region20
        $region19: #{tpu_custom_call.1} parent=11 // pred_region
          _
        $region20: #{tpu_custom_call.1} parent=11 // pred_fallthru
          _
      $region12: #{tpu_custom_call.1} parent=5 // pred_fallthru
        _
      %p146 = scmp.lt.s32.totalorder %s15, 4
      // Predicated region
      $region21: #{tpu_custom_call.1} parent=5 // pred_check
        %p147 = pneg %p146
      $region22: #{tpu_custom_call.1} parent=5 // pred_check_branch
        %149 = sbr.rel (%p147) target = $region24
      $region23: #{tpu_custom_call.1} parent=5 // pred_region
        // Predicated region
        $region25: #{tpu_custom_call.1} parent=23 // pred_check
          %p150 = pneg %p49
        $region26: #{tpu_custom_call.1} parent=23 // pred_check_branch
          %152 = sbr.rel (%p150) target = $region28
        $region27: #{tpu_custom_call.1} parent=23 // pred_region
          %s153 = sand.u32 %s39, 1
          %s154 = scalar_lea.sflag [#allocation4], %s153
          %s155 = sand.u32 %s39, 1
          %s156 = smul.addr %s155, 144
          %s157 = scalar_lea.vmem [#allocation3], %s156
          %s159 = ssub.s32 2304, 2304
          %160 = vsyncadd %s154, %s159
          %s161 = smul.addr %s23, 36
          %s162 = smul.addr %s22, 72
          %s163 = sadd.s32 %s161, %s162
          %s164 = smul.addr %s163, 64
          %s165 = scalar_lea.hbm %s0, %s164
          %s166 = sshll.u32 %s157, 4
          %s167 = int_to_ptr.vmem [resolvable:$true] %s166
          %172 = dma.hbm_to_vmem [thread:$0]  %s165, 2304, %s167, %s154, 1152, 1152, 72
        $region28: #{tpu_custom_call.1} parent=23 // pred_fallthru
          _
      $region24: #{tpu_custom_call.1} parent=5 // pred_fallthru
        _
      %p173 = scmp.le.s32.totalorder 1, %s15
      %p174 = scmp.lt.s32.totalorder %s15, 5
      %p175 = pnand %p173, %p174
      %p176 = pneg %p175
      // Predicated region
      $region29: #{tpu_custom_call.1} parent=5 // pred_check
        _
      $region30: #{tpu_custom_call.1} parent=5 // pred_check_branch
        %178 = sbr.rel (%p175) target = $region32
      $region31: #{tpu_custom_call.1} parent=5 // pred_region
        %s179 = ssub.s32 %s15, 1
        %s180 = sand.u32 %s42, 1
        %s181 = scalar_lea.sflag [#allocation4], %s180
        %s182 = sand.u32 %s42, 1
        %s183 = smul.addr %s182, 144
        %s184 = scalar_lea.vmem [#allocation3], %s183
        // Predicated region
        $region33: #{tpu_custom_call.1} parent=31 // pred_check
          %p185 = pneg %p55
        $region34: #{tpu_custom_call.1} parent=31 // pred_check_branch
          %187 = sbr.rel (%p185) target = $region36
        $region35: #{tpu_custom_call.1} parent=31 // pred_region
          %188 = dma.done %s181, 2304
        $region36: #{tpu_custom_call.1} parent=31 // pred_fallthru
          _
        %s189 = sand.u32 %s42, 1
        %s190 = scalar_lea.sflag [#allocation4], %s189
        %s191 = sand.u32 %s42, 1
        %s192 = smul.addr %s191, 144
        %s193 = scalar_lea.vmem [#allocation3], %s192
        %p194 = pneg %p55
        %p195 = pneg %p52
        %p196 = pneg %p76
        %p197 = pneg %p73
        %p198 = pneg %p97
        %p199 = pneg %p94
        %p200 = pneg %p125
        %p201 = pneg %p122
        %s202 = sand.u32 %s112, 1
        %s203 = scalar_lea.sflag [#allocation5], %s202
        %s204 = sand.u32 %s112, 1
        %s205 = smul.addr %s204, 512
        %s206 = scalar_lea.vmem [#allocation6], %s205
        %s207 = smul.u32 16, %s25
        %v209 = vld [vmem:[%s184] sm:$0xff]
        %v210 = vld [vmem:[%s184 + $0x8] sm:$0xff]
        %v211 = vld [vmem:[%s184 + $0x10] sm:$0xff]
        %v212 = vld [vmem:[%s184 + $0x18] sm:$0xff]
        %v213 = vld [vmem:[%s184 + $0x20] sm:$0xff]
        %v214 = vld [vmem:[%s184 + $0x28] sm:$0xff]
        %v215 = vld [vmem:[%s184 + $0x30] sm:$0xff]
        %v216 = vld [vmem:[%s184 + $0x38] sm:$0xff]
        %v217 = vld [vmem:[%s184 + $0x48] sm:$0xff]
        %v218 = vld [vmem:[%s184 + $0x50] sm:$0xff]
        %v219 = vld [vmem:[%s184 + $0x58] sm:$0xff]
        %v220 = vld [vmem:[%s184 + $0x60] sm:$0xff]
        %v221 = vld [vmem:[%s184 + $0x68] sm:$0xff]
        %v222 = vld [vmem:[%s184 + $0x70] sm:$0xff]
        %v223 = vld [vmem:[%s184 + $0x78] sm:$0xff]
        %v224 = vld [vmem:[%s184 + $0x80] sm:$0xff]
        %v241 = vunpack.c.l.b16 %v209
        %v242 = vunpack.c.h.b16 %v209
        %v243 = vunpack.c.l.b16 %v210
        %v244 = vunpack.c.h.b16 %v210
        %v245 = vunpack.c.l.b16 %v211
        %v246 = vunpack.c.h.b16 %v211
        %v247 = vunpack.c.l.b16 %v212
        %v248 = vunpack.c.h.b16 %v212
        %v249 = vunpack.c.l.b16 %v213
        %v250 = vunpack.c.h.b16 %v213
        %v251 = vunpack.c.l.b16 %v214
        %v252 = vunpack.c.h.b16 %v214
        %v253 = vunpack.c.l.b16 %v215
        %v254 = vunpack.c.h.b16 %v215
        %v255 = vunpack.c.l.b16 %v216
        %v256 = vunpack.c.h.b16 %v216
        %v257 = vunpack.c.l.b16 %v217
        %v258 = vunpack.c.h.b16 %v217
        %v259 = vunpack.c.l.b16 %v218
        %v260 = vunpack.c.h.b16 %v218
        %v261 = vunpack.c.l.b16 %v219
        %v262 = vunpack.c.h.b16 %v219
        %v263 = vunpack.c.l.b16 %v220
        %v264 = vunpack.c.h.b16 %v220
        %v265 = vunpack.c.l.b16 %v221
        %v266 = vunpack.c.h.b16 %v221
        %v267 = vunpack.c.l.b16 %v222
        %v268 = vunpack.c.h.b16 %v222
        %v269 = vunpack.c.l.b16 %v223
        %v270 = vunpack.c.h.b16 %v223
        %v271 = vunpack.c.l.b16 %v224
        %v272 = vunpack.c.h.b16 %v224
        %v273 = vpack.c.b16 %v257, %v241
        %v274 = vpack.c.b16 %v258, %v242
        %v275 = vpack.c.b16 %v259, %v243
        %v276 = vpack.c.b16 %v260, %v244
        %v277 = vpack.c.b16 %v261, %v245
        %v278 = vpack.c.b16 %v262, %v246
        %v279 = vpack.c.b16 %v263, %v247
        %v280 = vpack.c.b16 %v264, %v248
        %v281 = vpack.c.b16 %v265, %v249
        %v282 = vpack.c.b16 %v266, %v250
        %v283 = vpack.c.b16 %v267, %v251
        %v284 = vpack.c.b16 %v268, %v252
        %v285 = vpack.c.b16 %v269, %v253
        %v286 = vpack.c.b16 %v270, %v254
        %v287 = vpack.c.b16 %v271, %v255
        %v288 = vpack.c.b16 %v272, %v256
        %305 = vst [vmem:[#allocation2] sm:$0xff] %v273
        %306 = vst [vmem:[#allocation2 + $0x8] sm:$0xff] %v274
        %307 = vst [vmem:[#allocation2 + $0x10] sm:$0xff] %v275
        %308 = vst [vmem:[#allocation2 + $0x18] sm:$0xff] %v276
        %309 = vst [vmem:[#allocation2 + $0x20] sm:$0xff] %v277
        %310 = vst [vmem:[#allocation2 + $0x28] sm:$0xff] %v278
        %311 = vst [vmem:[#allocation2 + $0x30] sm:$0xff] %v279
        %312 = vst [vmem:[#allocation2 + $0x38] sm:$0xff] %v280
        %313 = vst [vmem:[#allocation2 + $0x40] sm:$0xff] %v281
        %314 = vst [vmem:[#allocation2 + $0x48] sm:$0xff] %v282
        %315 = vst [vmem:[#allocation2 + $0x50] sm:$0xff] %v283
        %316 = vst [vmem:[#allocation2 + $0x58] sm:$0xff] %v284
        %317 = vst [vmem:[#allocation2 + $0x60] sm:$0xff] %v285
        %318 = vst [vmem:[#allocation2 + $0x68] sm:$0xff] %v286
        %319 = vst [vmem:[#allocation2 + $0x70] sm:$0xff] %v287
        %320 = vst [vmem:[#allocation2 + $0x78] sm:$0xff] %v288
        %v321 = vld [vmem:[%s184] sm:$0xff]
        %v322 = vld [vmem:[%s184 + $0x8] sm:$0xff]
        %v323 = vld [vmem:[%s184 + $0x10] sm:$0xff]
        %v324 = vld [vmem:[%s184 + $0x18] sm:$0xff]
        %v325 = vld [vmem:[%s184 + $0x20] sm:$0xff]
        %v326 = vld [vmem:[%s184 + $0x28] sm:$0xff]
        %v327 = vld [vmem:[%s184 + $0x30] sm:$0xff]
        %v328 = vld [vmem:[%s184 + $0x38] sm:$0xff]
        %v329 = vld [vmem:[%s184 + $0x40] sm:$0xf]
        %v330 = vld [vmem:[%s184 + $0x48] sm:$0xff]
        %v331 = vld [vmem:[%s184 + $0x50] sm:$0xff]
        %v332 = vld [vmem:[%s184 + $0x58] sm:$0xff]
        %v333 = vld [vmem:[%s184 + $0x60] sm:$0xff]
        %v334 = vld [vmem:[%s184 + $0x68] sm:$0xff]
        %v335 = vld [vmem:[%s184 + $0x70] sm:$0xff]
        %v336 = vld [vmem:[%s184 + $0x78] sm:$0xff]
        %v337 = vld [vmem:[%s184 + $0x80] sm:$0xff]
        %v338 = vld [vmem:[%s184 + $0x88] sm:$0xf]
        %v357 = vunpack.c.l.b16 %v321
        %v358 = vunpack.c.h.b16 %v321
        %v359 = vunpack.c.l.b16 %v322
        %v360 = vunpack.c.h.b16 %v322
        %v361 = vunpack.c.l.b16 %v323
        %v362 = vunpack.c.h.b16 %v323
        %v363 = vunpack.c.l.b16 %v324
        %v364 = vunpack.c.h.b16 %v324
        %v365 = vunpack.c.l.b16 %v325
        %v366 = vunpack.c.h.b16 %v325
        %v367 = vunpack.c.l.b16 %v326
        %v368 = vunpack.c.h.b16 %v326
        %v369 = vunpack.c.l.b16 %v327
        %v370 = vunpack.c.h.b16 %v327
        %v371 = vunpack.c.l.b16 %v328
        %v372 = vunpack.c.h.b16 %v328
        %v373 = vunpack.c.l.b16 %v329
        %v374 = vunpack.c.l.b16 %v330
        %v375 = vunpack.c.h.b16 %v330
        %v376 = vunpack.c.l.b16 %v331
        %v377 = vunpack.c.h.b16 %v331
        %v378 = vunpack.c.l.b16 %v332
        %v379 = vunpack.c.h.b16 %v332
        %v380 = vunpack.c.l.b16 %v333
        %v381 = vunpack.c.h.b16 %v333
        %v382 = vunpack.c.l.b16 %v334
        %v383 = vunpack.c.h.b16 %v334
        %v384 = vunpack.c.l.b16 %v335
        %v385 = vunpack.c.h.b16 %v335
        %v386 = vunpack.c.l.b16 %v336
        %v387 = vunpack.c.h.b16 %v336
        %v388 = vunpack.c.l.b16 %v337
        %v389 = vunpack.c.h.b16 %v337
        %v390 = vunpack.c.l.b16 %v338
        %v391 = vpack.c.b16 %v374, %v357
        %v392 = vpack.c.b16 %v375, %v358
        %v393 = vpack.c.b16 %v376, %v359
        %v394 = vpack.c.b16 %v377, %v360
        %v395 = vpack.c.b16 %v378, %v361
        %v396 = vpack.c.b16 %v379, %v362
        %v397 = vpack.c.b16 %v380, %v363
        %v398 = vpack.c.b16 %v381, %v364
        %v399 = vpack.c.b16 %v382, %v365
        %v400 = vpack.c.b16 %v383, %v366
        %v401 = vpack.c.b16 %v384, %v367
        %v402 = vpack.c.b16 %v385, %v368
        %v403 = vpack.c.b16 %v386, %v369
        %v404 = vpack.c.b16 %v387, %v370
        %v405 = vpack.c.b16 %v388, %v371
        %v406 = vpack.c.b16 %v389, %v372
        %v407 = vpack.c.b16 %v390, %v373
        %408 = vrot.lane.b32.xlu0 %v391, 127
        %v409 = vpop.permute.xlu0 %408
        %410 = vrot.lane.b32.xlu0 %v392, 127
        %v411 = vpop.permute.xlu0 %410
        %412 = vrot.lane.b32.xlu0 %v393, 127
        %v413 = vpop.permute.xlu0 %412
        %414 = vrot.lane.b32.xlu0 %v394, 127
        %v415 = vpop.permute.xlu0 %414
        %416 = vrot.lane.b32.xlu0 %v395, 127
        %v417 = vpop.permute.xlu0 %416
        %418 = vrot.lane.b32.xlu0 %v396, 127
        %v419 = vpop.permute.xlu0 %418
        %420 = vrot.lane.b32.xlu0 %v397, 127
        %v421 = vpop.permute.xlu0 %420
        %422 = vrot.lane.b32.xlu0 %v398, 127
        %v423 = vpop.permute.xlu0 %422
        %424 = vrot.lane.b32.xlu0 %v399, 127
        %v425 = vpop.permute.xlu0 %424
        %426 = vrot.lane.b32.xlu0 %v400, 127
        %v427 = vpop.permute.xlu0 %426
        %428 = vrot.lane.b32.xlu0 %v401, 127
        %v429 = vpop.permute.xlu0 %428
        %430 = vrot.lane.b32.xlu0 %v402, 127
        %v431 = vpop.permute.xlu0 %430
        %432 = vrot.lane.b32.xlu0 %v403, 127
        %v433 = vpop.permute.xlu0 %432
        %434 = vrot.lane.b32.xlu0 %v404, 127
        %v435 = vpop.permute.xlu0 %434
        %436 = vrot.lane.b32.xlu0 %v405, 127
        %v437 = vpop.permute.xlu0 %436
        %438 = vrot.lane.b32.xlu0 %v406, 127
        %v439 = vpop.permute.xlu0 %438
        %440 = vrot.lane.b32.xlu0 %v407, 127
        %v441 = vpop.permute.xlu0 %440
        %vm442 = vcmask 1039360
        %v443 = vsel %vm442, %v409, %v411
        %v444 = vsel %vm442, %v411, %v413
        %v445 = vsel %vm442, %v413, %v415
        %v446 = vsel %vm442, %v415, %v417
        %v447 = vsel %vm442, %v417, %v419
        %v448 = vsel %vm442, %v419, %v421
        %v449 = vsel %vm442, %v421, %v423
        %v450 = vsel %vm442, %v423, %v425
        %v451 = vsel %vm442, %v425, %v427
        %v452 = vsel %vm442, %v427, %v429
        %v453 = vsel %vm442, %v429, %v431
        %v454 = vsel %vm442, %v431, %v433
        %v455 = vsel %vm442, %v433, %v435
        %v456 = vsel %vm442, %v435, %v437
        %v457 = vsel %vm442, %v437, %v439
        %v458 = vsel %vm442, %v439, %v441
        %475 = vst [vmem:[#allocation2 + $0x80] sm:$0xff] %v443
        %476 = vst [vmem:[#allocation2 + $0x88] sm:$0xff] %v444
        %477 = vst [vmem:[#allocation2 + $0x90] sm:$0xff] %v445
        %478 = vst [vmem:[#allocation2 + $0x98] sm:$0xff] %v446
        %479 = vst [vmem:[#allocation2 + $0xa0] sm:$0xff] %v447
        %480 = vst [vmem:[#allocation2 + $0xa8] sm:$0xff] %v448
        %481 = vst [vmem:[#allocation2 + $0xb0] sm:$0xff] %v449
        %482 = vst [vmem:[#allocation2 + $0xb8] sm:$0xff] %v450
        %483 = vst [vmem:[#allocation2 + $0xc0] sm:$0xff] %v451
        %484 = vst [vmem:[#allocation2 + $0xc8] sm:$0xff] %v452
        %485 = vst [vmem:[#allocation2 + $0xd0] sm:$0xff] %v453
        %486 = vst [vmem:[#allocation2 + $0xd8] sm:$0xff] %v454
        %487 = vst [vmem:[#allocation2 + $0xe0] sm:$0xff] %v455
        %488 = vst [vmem:[#allocation2 + $0xe8] sm:$0xff] %v456
        %489 = vst [vmem:[#allocation2 + $0xf0] sm:$0xff] %v457
        %490 = vst [vmem:[#allocation2 + $0xf8] sm:$0xff] %v458
        %v491 = vld [vmem:[%s184 + $0x4] sm:$0xff]
        %v492 = vld [vmem:[%s184 + $0xc] sm:$0xff]
        %v493 = vld [vmem:[%s184 + $0x14] sm:$0xff]
        %v494 = vld [vmem:[%s184 + $0x1c] sm:$0xff]
        %v495 = vld [vmem:[%s184 + $0x24] sm:$0xff]
        %v496 = vld [vmem:[%s184 + $0x2c] sm:$0xff]
        %v497 = vld [vmem:[%s184 + $0x34] sm:$0xff]
        %v498 = vld [vmem:[%s184 + $0x3c] sm:$0xff]
        %v499 = vld [vmem:[%s184 + $0x4c] sm:$0xff]
        %v500 = vld [vmem:[%s184 + $0x54] sm:$0xff]
        %v501 = vld [vmem:[%s184 + $0x5c] sm:$0xff]
        %v502 = vld [vmem:[%s184 + $0x64] sm:$0xff]
        %v503 = vld [vmem:[%s184 + $0x6c] sm:$0xff]
        %v504 = vld [vmem:[%s184 + $0x74] sm:$0xff]
        %v505 = vld [vmem:[%s184 + $0x7c] sm:$0xff]
        %v506 = vld [vmem:[%s184 + $0x84] sm:$0xff]
        %v523 = vunpack.c.l.b16 %v491
        %v524 = vunpack.c.h.b16 %v491
        %v525 = vunpack.c.l.b16 %v492
        %v526 = vunpack.c.h.b16 %v492
        %v527 = vunpack.c.l.b16 %v493
        %v528 = vunpack.c.h.b16 %v493
        %v529 = vunpack.c.l.b16 %v494
        %v530 = vunpack.c.h.b16 %v494
        %v531 = vunpack.c.l.b16 %v495
        %v532 = vunpack.c.h.b16 %v495
        %v533 = vunpack.c.l.b16 %v496
        %v534 = vunpack.c.h.b16 %v496
        %v535 = vunpack.c.l.b16 %v497
        %v536 = vunpack.c.h.b16 %v497
        %v537 = vunpack.c.l.b16 %v498
        %v538 = vunpack.c.h.b16 %v498
        %v539 = vunpack.c.l.b16 %v499
        %v540 = vunpack.c.h.b16 %v499
        %v541 = vunpack.c.l.b16 %v500
        %v542 = vunpack.c.h.b16 %v500
        %v543 = vunpack.c.l.b16 %v501
        %v544 = vunpack.c.h.b16 %v501
        %v545 = vunpack.c.l.b16 %v502
        %v546 = vunpack.c.h.b16 %v502
        %v547 = vunpack.c.l.b16 %v503
        %v548 = vunpack.c.h.b16 %v503
        %v549 = vunpack.c.l.b16 %v504
        %v550 = vunpack.c.h.b16 %v504
        %v551 = vunpack.c.l.b16 %v505
        %v552 = vunpack.c.h.b16 %v505
        %v553 = vunpack.c.l.b16 %v506
        %v554 = vunpack.c.h.b16 %v506
        %v555 = vpack.c.b16 %v539, %v523
        %v556 = vpack.c.b16 %v540, %v524
        %v557 = vpack.c.b16 %v541, %v525
        %v558 = vpack.c.b16 %v542, %v526
        %v559 = vpack.c.b16 %v543, %v527
        %v560 = vpack.c.b16 %v544, %v528
        %v561 = vpack.c.b16 %v545, %v529
        %v562 = vpack.c.b16 %v546, %v530
        %v563 = vpack.c.b16 %v547, %v531
        %v564 = vpack.c.b16 %v548, %v532
        %v565 = vpack.c.b16 %v549, %v533
        %v566 = vpack.c.b16 %v550, %v534
        %v567 = vpack.c.b16 %v551, %v535
        %v568 = vpack.c.b16 %v552, %v536
        %v569 = vpack.c.b16 %v553, %v537
        %v570 = vpack.c.b16 %v554, %v538
        %587 = vst [vmem:[#allocation2 + $0x100] sm:$0xff] %v555
        %588 = vst [vmem:[#allocation2 + $0x108] sm:$0xff] %v556
        %589 = vst [vmem:[#allocation2 + $0x110] sm:$0xff] %v557
        %590 = vst [vmem:[#allocation2 + $0x118] sm:$0xff] %v558
        %591 = vst [vmem:[#allocation2 + $0x120] sm:$0xff] %v559
        %592 = vst [vmem:[#allocation2 + $0x128] sm:$0xff] %v560
        %593 = vst [vmem:[#allocation2 + $0x130] sm:$0xff] %v561
        %594 = vst [vmem:[#allocation2 + $0x138] sm:$0xff] %v562
        %595 = vst [vmem:[#allocation2 + $0x140] sm:$0xff] %v563
        %596 = vst [vmem:[#allocation2 + $0x148] sm:$0xff] %v564
        %597 = vst [vmem:[#allocation2 + $0x150] sm:$0xff] %v565
        %598 = vst [vmem:[#allocation2 + $0x158] sm:$0xff] %v566
        %599 = vst [vmem:[#allocation2 + $0x160] sm:$0xff] %v567
        %600 = vst [vmem:[#allocation2 + $0x168] sm:$0xff] %v568
        %601 = vst [vmem:[#allocation2 + $0x170] sm:$0xff] %v569
        %602 = vst [vmem:[#allocation2 + $0x178] sm:$0xff] %v570
        %v603 = vld [vmem:[%s184 + $0x4] sm:$0xff]
        %v604 = vld [vmem:[%s184 + $0xc] sm:$0xff]
        %v605 = vld [vmem:[%s184 + $0x14] sm:$0xff]
        %v606 = vld [vmem:[%s184 + $0x1c] sm:$0xff]
        %v607 = vld [vmem:[%s184 + $0x24] sm:$0xff]
        %v608 = vld [vmem:[%s184 + $0x2c] sm:$0xff]
        %v609 = vld [vmem:[%s184 + $0x34] sm:$0xff]
        %v610 = vld [vmem:[%s184 + $0x3c] sm:$0xff]
        %v611 = vld [vmem:[%s184 + $0x44] sm:$0xf]
        %v612 = vld [vmem:[%s184 + $0x4c] sm:$0xff]
        %v613 = vld [vmem:[%s184 + $0x54] sm:$0xff]
        %v614 = vld [vmem:[%s184 + $0x5c] sm:$0xff]
        %v615 = vld [vmem:[%s184 + $0x64] sm:$0xff]
        %v616 = vld [vmem:[%s184 + $0x6c] sm:$0xff]
        %v617 = vld [vmem:[%s184 + $0x74] sm:$0xff]
        %v618 = vld [vmem:[%s184 + $0x7c] sm:$0xff]
        %v619 = vld [vmem:[%s184 + $0x84] sm:$0xff]
        %v620 = vld [vmem:[%s184 + $0x8c] sm:$0xf]
        %v639 = vunpack.c.l.b16 %v603
        %v640 = vunpack.c.h.b16 %v603
        %v641 = vunpack.c.l.b16 %v604
        %v642 = vunpack.c.h.b16 %v604
        %v643 = vunpack.c.l.b16 %v605
        %v644 = vunpack.c.h.b16 %v605
        %v645 = vunpack.c.l.b16 %v606
        %v646 = vunpack.c.h.b16 %v606
        %v647 = vunpack.c.l.b16 %v607
        %v648 = vunpack.c.h.b16 %v607
        %v649 = vunpack.c.l.b16 %v608
        %v650 = vunpack.c.h.b16 %v608
        %v651 = vunpack.c.l.b16 %v609
        %v652 = vunpack.c.h.b16 %v609
        %v653 = vunpack.c.l.b16 %v610
        %v654 = vunpack.c.h.b16 %v610
        %v655 = vunpack.c.l.b16 %v611
        %v656 = vunpack.c.l.b16 %v612
        %v657 = vunpack.c.h.b16 %v612
        %v658 = vunpack.c.l.b16 %v613
        %v659 = vunpack.c.h.b16 %v613
        %v660 = vunpack.c.l.b16 %v614
        %v661 = vunpack.c.h.b16 %v614
        %v662 = vunpack.c.l.b16 %v615
        %v663 = vunpack.c.h.b16 %v615
        %v664 = vunpack.c.l.b16 %v616
        %v665 = vunpack.c.h.b16 %v616
        %v666 = vunpack.c.l.b16 %v617
        %v667 = vunpack.c.h.b16 %v617
        %v668 = vunpack.c.l.b16 %v618
        %v669 = vunpack.c.h.b16 %v618
        %v670 = vunpack.c.l.b16 %v619
        %v671 = vunpack.c.h.b16 %v619
        %v672 = vunpack.c.l.b16 %v620
        %v673 = vpack.c.b16 %v656, %v639
        %v674 = vpack.c.b16 %v657, %v640
        %v675 = vpack.c.b16 %v658, %v641
        %v676 = vpack.c.b16 %v659, %v642
        %v677 = vpack.c.b16 %v660, %v643
        %v678 = vpack.c.b16 %v661, %v644
        %v679 = vpack.c.b16 %v662, %v645
        %v680 = vpack.c.b16 %v663, %v646
        %v681 = vpack.c.b16 %v664, %v647
        %v682 = vpack.c.b16 %v665, %v648
        %v683 = vpack.c.b16 %v666, %v649
        %v684 = vpack.c.b16 %v667, %v650
        %v685 = vpack.c.b16 %v668, %v651
        %v686 = vpack.c.b16 %v669, %v652
        %v687 = vpack.c.b16 %v670, %v653
        %v688 = vpack.c.b16 %v671, %v654
        %v689 = vpack.c.b16 %v672, %v655
        %690 = vrot.lane.b32.xlu0 %v673, 127
        %v691 = vpop.permute.xlu0 %690
        %692 = vrot.lane.b32.xlu0 %v674, 127
        %v693 = vpop.permute.xlu0 %692
        %694 = vrot.lane.b32.xlu0 %v675, 127
        %v695 = vpop.permute.xlu0 %694
        %696 = vrot.lane.b32.xlu0 %v676, 127
        %v697 = vpop.permute.xlu0 %696
        %698 = vrot.lane.b32.xlu0 %v677, 127
        %v699 = vpop.permute.xlu0 %698
        %700 = vrot.lane.b32.xlu0 %v678, 127
        %v701 = vpop.permute.xlu0 %700
        %702 = vrot.lane.b32.xlu0 %v679, 127
        %v703 = vpop.permute.xlu0 %702
        %704 = vrot.lane.b32.xlu0 %v680, 127
        %v705 = vpop.permute.xlu0 %704
        %706 = vrot.lane.b32.xlu0 %v681, 127
        %v707 = vpop.permute.xlu0 %706
        %708 = vrot.lane.b32.xlu0 %v682, 127
        %v709 = vpop.permute.xlu0 %708
        %710 = vrot.lane.b32.xlu0 %v683, 127
        %v711 = vpop.permute.xlu0 %710
        %712 = vrot.lane.b32.xlu0 %v684, 127
        %v713 = vpop.permute.xlu0 %712
        %714 = vrot.lane.b32.xlu0 %v685, 127
        %v715 = vpop.permute.xlu0 %714
        %716 = vrot.lane.b32.xlu0 %v686, 127
        %v717 = vpop.permute.xlu0 %716
        %718 = vrot.lane.b32.xlu0 %v687, 127
        %v719 = vpop.permute.xlu0 %718
        %720 = vrot.lane.b32.xlu0 %v688, 127
        %v721 = vpop.permute.xlu0 %720
        %722 = vrot.lane.b32.xlu0 %v689, 127
        %v723 = vpop.permute.xlu0 %722
        %v724 = vsel %vm442, %v691, %v693
        %v725 = vsel %vm442, %v693, %v695
        %v726 = vsel %vm442, %v695, %v697
        %v727 = vsel %vm442, %v697, %v699
        %v728 = vsel %vm442, %v699, %v701
        %v729 = vsel %vm442, %v701, %v703
        %v730 = vsel %vm442, %v703, %v705
        %v731 = vsel %vm442, %v705, %v707
        %v732 = vsel %vm442, %v707, %v709
        %v733 = vsel %vm442, %v709, %v711
        %v734 = vsel %vm442, %v711, %v713
        %v735 = vsel %vm442, %v713, %v715
        %v736 = vsel %vm442, %v715, %v717
        %v737 = vsel %vm442, %v717, %v719
        %v738 = vsel %vm442, %v719, %v721
        %v739 = vsel %vm442, %v721, %v723
        %756 = vst [vmem:[#allocation2 + $0x180] sm:$0xff] %v724
        %757 = vst [vmem:[#allocation2 + $0x188] sm:$0xff] %v725
        %758 = vst [vmem:[#allocation2 + $0x190] sm:$0xff] %v726
        %759 = vst [vmem:[#allocation2 + $0x198] sm:$0xff] %v727
        %760 = vst [vmem:[#allocation2 + $0x1a0] sm:$0xff] %v728
        %761 = vst [vmem:[#allocation2 + $0x1a8] sm:$0xff] %v729
        %762 = vst [vmem:[#allocation2 + $0x1b0] sm:$0xff] %v730
        %763 = vst [vmem:[#allocation2 + $0x1b8] sm:$0xff] %v731
        %764 = vst [vmem:[#allocation2 + $0x1c0] sm:$0xff] %v732
        %765 = vst [vmem:[#allocation2 + $0x1c8] sm:$0xff] %v733
        %766 = vst [vmem:[#allocation2 + $0x1d0] sm:$0xff] %v734
        %767 = vst [vmem:[#allocation2 + $0x1d8] sm:$0xff] %v735
        %768 = vst [vmem:[#allocation2 + $0x1e0] sm:$0xff] %v736
        %769 = vst [vmem:[#allocation2 + $0x1e8] sm:$0xff] %v737
        %770 = vst [vmem:[#allocation2 + $0x1f0] sm:$0xff] %v738
        %771 = vst [vmem:[#allocation2 + $0x1f8] sm:$0xff] %v739
        %v772 = vld [vmem:[%s1] sm:$0xf]
        %v773 = vld [vmem:[%s1 + $0x4] sm:$0xf]
        %v774 = vld [vmem:[%s1 + $0x8] sm:$0xf]
        %v775 = vld [vmem:[%s1 + $0xc] sm:$0xf]
        %v776 = vld [vmem:[#allocation2] sm:$0xff]
        %v777 = vld [vmem:[#allocation2 + $0x8] sm:$0xff]
        %v778 = vld [vmem:[#allocation2 + $0x10] sm:$0xff]
        %v779 = vld [vmem:[#allocation2 + $0x18] sm:$0xff]
        %v780 = vld [vmem:[#allocation2 + $0x20] sm:$0xff]
        %v781 = vld [vmem:[#allocation2 + $0x28] sm:$0xff]
        %v782 = vld [vmem:[#allocation2 + $0x30] sm:$0xff]
        %v783 = vld [vmem:[#allocation2 + $0x38] sm:$0xff]
        %v784 = vld [vmem:[#allocation2 + $0x40] sm:$0xff]
        %v785 = vld [vmem:[#allocation2 + $0x48] sm:$0xff]
        %v786 = vld [vmem:[#allocation2 + $0x50] sm:$0xff]
        %v787 = vld [vmem:[#allocation2 + $0x58] sm:$0xff]
        %v788 = vld [vmem:[#allocation2 + $0x60] sm:$0xff]
        %v789 = vld [vmem:[#allocation2 + $0x68] sm:$0xff]
        %v790 = vld [vmem:[#allocation2 + $0x70] sm:$0xff]
        %v791 = vld [vmem:[#allocation2 + $0x78] sm:$0xff]
        %v792 = vld [vmem:[#allocation2 + $0x80] sm:$0xff]
        %v793 = vld [vmem:[#allocation2 + $0x88] sm:$0xff]
        %v794 = vld [vmem:[#allocation2 + $0x90] sm:$0xff]
        %v795 = vld [vmem:[#allocation2 + $0x98] sm:$0xff]
        %v796 = vld [vmem:[#allocation2 + $0xa0] sm:$0xff]
        %v797 = vld [vmem:[#allocation2 + $0xa8] sm:$0xff]
        %v798 = vld [vmem:[#allocation2 + $0xb0] sm:$0xff]
        %v799 = vld [vmem:[#allocation2 + $0xb8] sm:$0xff]
        %v800 = vld [vmem:[#allocation2 + $0xc0] sm:$0xff]
        %v801 = vld [vmem:[#allocation2 + $0xc8] sm:$0xff]
        %v802 = vld [vmem:[#allocation2 + $0xd0] sm:$0xff]
        %v803 = vld [vmem:[#allocation2 + $0xd8] sm:$0xff]
        %v804 = vld [vmem:[#allocation2 + $0xe0] sm:$0xff]
        %v805 = vld [vmem:[#allocation2 + $0xe8] sm:$0xff]
        %v806 = vld [vmem:[#allocation2 + $0xf0] sm:$0xff]
        %v807 = vld [vmem:[#allocation2 + $0xf8] sm:$0xff]
        %v808 = vld [vmem:[#allocation2 + $0x100] sm:$0xff]
        %v809 = vld [vmem:[#allocation2 + $0x108] sm:$0xff]
        %v810 = vld [vmem:[#allocation2 + $0x110] sm:$0xff]
        %v811 = vld [vmem:[#allocation2 + $0x118] sm:$0xff]
        %v812 = vld [vmem:[#allocation2 + $0x120] sm:$0xff]
        %v813 = vld [vmem:[#allocation2 + $0x128] sm:$0xff]
        %v814 = vld [vmem:[#allocation2 + $0x130] sm:$0xff]
        %v815 = vld [vmem:[#allocation2 + $0x138] sm:$0xff]
        %v816 = vld [vmem:[#allocation2 + $0x140] sm:$0xff]
        %v817 = vld [vmem:[#allocation2 + $0x148] sm:$0xff]
        %v818 = vld [vmem:[#allocation2 + $0x150] sm:$0xff]
        %v819 = vld [vmem:[#allocation2 + $0x158] sm:$0xff]
        %v820 = vld [vmem:[#allocation2 + $0x160] sm:$0xff]
        %v821 = vld [vmem:[#allocation2 + $0x168] sm:$0xff]
        %v822 = vld [vmem:[#allocation2 + $0x170] sm:$0xff]
        %v823 = vld [vmem:[#allocation2 + $0x178] sm:$0xff]
        %v824 = vld [vmem:[#allocation2 + $0x180] sm:$0xff]
        %v825 = vld [vmem:[#allocation2 + $0x188] sm:$0xff]
        %v826 = vld [vmem:[#allocation2 + $0x190] sm:$0xff]
        %v827 = vld [vmem:[#allocation2 + $0x198] sm:$0xff]
        %v828 = vld [vmem:[#allocation2 + $0x1a0] sm:$0xff]
        %v829 = vld [vmem:[#allocation2 + $0x1a8] sm:$0xff]
        %v830 = vld [vmem:[#allocation2 + $0x1b0] sm:$0xff]
        %v831 = vld [vmem:[#allocation2 + $0x1b8] sm:$0xff]
        %v832 = vld [vmem:[#allocation2 + $0x1c0] sm:$0xff]
        %v833 = vld [vmem:[#allocation2 + $0x1c8] sm:$0xff]
        %v834 = vld [vmem:[#allocation2 + $0x1d0] sm:$0xff]
        %v835 = vld [vmem:[#allocation2 + $0x1d8] sm:$0xff]
        %v836 = vld [vmem:[#allocation2 + $0x1e0] sm:$0xff]
        %v837 = vld [vmem:[#allocation2 + $0x1e8] sm:$0xff]
        %v838 = vld [vmem:[#allocation2 + $0x1f0] sm:$0xff]
        %v839 = vld [vmem:[#allocation2 + $0x1f8] sm:$0xff]
        %v840 = vld [vmem:[%s2] sm:$0xff]
        %v841 = vld [vmem:[%s2 + $0x8] sm:$0xff]
        %v842 = vld [vmem:[%s2 + $0x10] sm:$0xff]
        %v843 = vld [vmem:[%s2 + $0x18] sm:$0xff]
        %845 = vset.pattern.permute.xlu0 0
        %846 = vperm.xlu0 %845, %v840
        %v847 = vpop.permute.xlu0 %846
        %850 = vset.pattern.permute.xlu0 0
        %851 = vperm.xlu0 %850, %v841
        %v852 = vpop.permute.xlu0 %851
        %855 = vset.pattern.permute.xlu0 0
        %856 = vperm.xlu0 %855, %v842
        %v857 = vpop.permute.xlu0 %856
        %860 = vset.pattern.permute.xlu0 0
        %861 = vperm.xlu0 %860, %v843
        %v862 = vpop.permute.xlu0 %861
        %v868 = vunpack.c.l.b16 %v772
        %v869 = vunpack.c.l.b16 %v773
        %v870 = vunpack.c.l.b16 %v774
        %v871 = vunpack.c.l.b16 %v775
        %v872 = vpack.c.b16 %v869, %v868
        %v873 = vpack.c.b16 %v871, %v870
        %vm874 = vcmask 523264
        %v876 = vsel %vm874, %v872, 0
        %v879 = vsel %vm874, %v873, 0
        %881 = vmatprep.subr.bf16.mxu0 %v777
        %882 = vmatpush1.bf16.msra.mxu0 %v776
        %883 = vmatprep.subr.bf16.mxu0 %v793
        %884 = vmatpush1.bf16.msra.mxu0 %v792
        %885 = vmatprep.subr.bf16.mxu0 %v809
        %886 = vmatpush1.bf16.msra.mxu0 %v808
        %887 = vmatprep.subr.bf16.mxu0 %v825
        %888 = vmatpush1.bf16.msra.mxu0 %v824
        %889 = vmatprep.subr.bf16.mxu0 0
        %890 = vmatpush1.bf16.msra.mxu0 0
        %891 = vmatprep.subr.bf16.mxu0 0
        %892 = vmatpush1.bf16.msra.mxu0 0
        %893 = vmatprep.subr.bf16.mxu0 0
        %894 = vmatpush1.bf16.msra.mxu0 0
        %895 = vmatprep.subr.bf16.mxu0 0
        %896 = vmatpush1.bf16.msra.mxu0 0
        %897 = vmatprep.subr.bf16.mxu0 0
        %898 = vmatpush1.bf16.msra.mxu0 0
        %899 = vmatprep.subr.bf16.mxu0 0
        %900 = vmatpush1.bf16.msra.mxu0 0
        %901 = vmatprep.subr.bf16.mxu0 0
        %902 = vmatpush1.bf16.msra.mxu0 0
        %903 = vmatprep.subr.bf16.mxu0 0
        %904 = vmatpush1.bf16.msra.mxu0 0
        %905 = vmatprep.subr.bf16.mxu0 0
        %906 = vmatpush1.bf16.msra.mxu0 0
        %907 = vmatprep.subr.bf16.mxu0 0
        %908 = vmatpush1.bf16.msra.mxu0 0
        %909 = vmatprep.subr.bf16.mxu0 0
        %910 = vmatpush1.bf16.msra.mxu0 0
        %911 = vmatprep.subr.bf16.mxu0 0
        %912 = vmatpush1.bf16.msra.mxu0 0
        %913 = vmatprep.mubr.bf16.mxu0 0
        %914 = vmatmul.mubr.bf16.gmra.mrb[0].mxu0 %v876
        %v915 = vpop.f32.mrb[0].mxu0
        %v916 = vadd.f32 %v847, %v915
        %v917 = vpop.f32.mrb[0].mxu0
        %v918 = vadd.f32 %v847, %v917
        %v919 = vpop.f32.mrb[0].mxu0
        %v920 = vadd.f32 %v852, %v919
        %v921 = vpop.f32.mrb[0].mxu0
        %v922 = vadd.f32 %v852, %v921
        %923 = vmatprep.mubr.bf16.mxu0 0
        %924 = vmatmul.mubr.bf16.gmra.mrb[0].mxu0 %v879
        %v925 = vpop.f32.mrb[0].mxu0
        %v926 = vadd.f32 %v857, %v925
        %v927 = vpop.f32.mrb[0].mxu0
        %v928 = vadd.f32 %v857, %v927
        %v929 = vpop.f32.mrb[0].mxu0
        %v930 = vadd.f32 %v862, %v929
        %v931 = vpop.f32.mrb[0].mxu0
        %v932 = vadd.f32 %v862, %v931
        %933 = vdwg.mxu0
        %934 = vmatprep.subr.bf16.mxu0 %v779
        %935 = vmatpush1.bf16.msra.mxu0 %v778
        %936 = vmatprep.subr.bf16.mxu0 %v795
        %937 = vmatpush1.bf16.msra.mxu0 %v794
        %938 = vmatprep.subr.bf16.mxu0 %v811
        %939 = vmatpush1.bf16.msra.mxu0 %v810
        %940 = vmatprep.subr.bf16.mxu0 %v827
        %941 = vmatpush1.bf16.msra.mxu0 %v826
        %942 = vmatprep.subr.bf16.mxu0 0
        %943 = vmatpush1.bf16.msra.mxu0 0
        %944 = vmatprep.subr.bf16.mxu0 0
        %945 = vmatpush1.bf16.msra.mxu0 0
        %946 = vmatprep.subr.bf16.mxu0 0
        %947 = vmatpush1.bf16.msra.mxu0 0
        %948 = vmatprep.subr.bf16.mxu0 0
        %949 = vmatpush1.bf16.msra.mxu0 0
        %950 = vmatprep.subr.bf16.mxu0 0
        %951 = vmatpush1.bf16.msra.mxu0 0
        %952 = vmatprep.subr.bf16.mxu0 0
        %953 = vmatpush1.bf16.msra.mxu0 0
        %954 = vmatprep.subr.bf16.mxu0 0
        %955 = vmatpush1.bf16.msra.mxu0 0
        %956 = vmatprep.subr.bf16.mxu0 0
        %957 = vmatpush1.bf16.msra.mxu0 0
        %958 = vmatprep.subr.bf16.mxu0 0
        %959 = vmatpush1.bf16.msra.mxu0 0
        %960 = vmatprep.subr.bf16.mxu0 0
        %961 = vmatpush1.bf16.msra.mxu0 0
        %962 = vmatprep.subr.bf16.mxu0 0
        %963 = vmatpush1.bf16.msra.mxu0 0
        %964 = vmatprep.subr.bf16.mxu0 0
        %965 = vmatpush1.bf16.msra.mxu0 0
        %966 = vmatprep.mubr.bf16.mxu0 0
        %967 = vmatmul.mubr.bf16.gmra.mrb[0].mxu0 %v876
        %v968 = vpop.f32.mrb[0].mxu0
        %v969 = vadd.f32 %v847, %v968
        %v970 = vpop.f32.mrb[0].mxu0
        %v971 = vadd.f32 %v847, %v970
        %v972 = vpop.f32.mrb[0].mxu0
        %v973 = vadd.f32 %v852, %v972
        %v974 = vpop.f32.mrb[0].mxu0
        %v975 = vadd.f32 %v852, %v974
        %976 = vmatprep.mubr.bf16.mxu0 0
        %977 = vmatmul.mubr.bf16.gmra.mrb[0].mxu0 %v879
        %v978 = vpop.f32.mrb[0].mxu0
        %v979 = vadd.f32 %v857, %v978
        %v980 = vpop.f32.mrb[0].mxu0
        %v981 = vadd.f32 %v857, %v980
        %v982 = vpop.f32.mrb[0].mxu0
        %v983 = vadd.f32 %v862, %v982
        %v984 = vpop.f32.mrb[0].mxu0
        %v985 = vadd.f32 %v862, %v984
        %986 = vdwg.mxu0
        %987 = vmatprep.subr.bf16.mxu0 %v781
        %988 = vmatpush1.bf16.msra.mxu0 %v780
        %989 = vmatprep.subr.bf16.mxu0 %v797
        %990 = vmatpush1.bf16.msra.mxu0 %v796
        %991 = vmatprep.subr.bf16.mxu0 %v813
        %992 = vmatpush1.bf16.msra.mxu0 %v812
        %993 = vmatprep.subr.bf16.mxu0 %v829
        %994 = vmatpush1.bf16.msra.mxu0 %v828
        %995 = vmatprep.subr.bf16.mxu0 0
        %996 = vmatpush1.bf16.msra.mxu0 0
        %997 = vmatprep.subr.bf16.mxu0 0
        %998 = vmatpush1.bf16.msra.mxu0 0
        %999 = vmatprep.subr.bf16.mxu0 0
        %1000 = vmatpush1.bf16.msra.mxu0 0
        %1001 = vmatprep.subr.bf16.mxu0 0
        %1002 = vmatpush1.bf16.msra.mxu0 0
        %1003 = vmatprep.subr.bf16.mxu0 0
        %1004 = vmatpush1.bf16.msra.mxu0 0
        %1005 = vmatprep.subr.bf16.mxu0 0
        %1006 = vmatpush1.bf16.msra.mxu0 0
        %1007 = vmatprep.subr.bf16.mxu0 0
        %1008 = vmatpush1.bf16.msra.mxu0 0
        %1009 = vmatprep.subr.bf16.mxu0 0
        %1010 = vmatpush1.bf16.msra.mxu0 0
        %1011 = vmatprep.subr.bf16.mxu0 0
        %1012 = vmatpush1.bf16.msra.mxu0 0
        %1013 = vmatprep.subr.bf16.mxu0 0
        %1014 = vmatpush1.bf16.msra.mxu0 0
        %1015 = vmatprep.subr.bf16.mxu0 0
        %1016 = vmatpush1.bf16.msra.mxu0 0
        %1017 = vmatprep.subr.bf16.mxu0 0
        %1018 = vmatpush1.bf16.msra.mxu0 0
        %1019 = vmatprep.mubr.bf16.mxu0 0
        %1020 = vmatmul.mubr.bf16.gmra.mrb[0].mxu0 %v876
        %v1021 = vpop.f32.mrb[0].mxu0
        %v1022 = vadd.f32 %v847, %v1021
        %v1023 = vpop.f32.mrb[0].mxu0
        %v1024 = vadd.f32 %v847, %v1023
        %v1025 = vpop.f32.mrb[0].mxu0
        %v1026 = vadd.f32 %v852, %v1025
        %v1027 = vpop.f32.mrb[0].mxu0
        %v1028 = vadd.f32 %v852, %v1027
        %1029 = vmatprep.mubr.bf16.mxu0 0
        %1030 = vmatmul.mubr.bf16.gmra.mrb[0].mxu0 %v879
        %v1031 = vpop.f32.mrb[0].mxu0
        %v1032 = vadd.f32 %v857, %v1031
        %v1033 = vpop.f32.mrb[0].mxu0
        %v1034 = vadd.f32 %v857, %v1033
        %v1035 = vpop.f32.mrb[0].mxu0
        %v1036 = vadd.f32 %v862, %v1035
        %v1037 = vpop.f32.mrb[0].mxu0
        %v1038 = vadd.f32 %v862, %v1037
        %1039 = vdwg.mxu0
        %1040 = vmatprep.subr.bf16.mxu0 %v783
        %1041 = vmatpush1.bf16.msra.mxu0 %v782
        %1042 = vmatprep.subr.bf16.mxu0 %v799
        %1043 = vmatpush1.bf16.msra.mxu0 %v798
        %1044 = vmatprep.subr.bf16.mxu0 %v815
        %1045 = vmatpush1.bf16.msra.mxu0 %v814
        %1046 = vmatprep.subr.bf16.mxu0 %v831
        %1047 = vmatpush1.bf16.msra.mxu0 %v830
        %1048 = vmatprep.subr.bf16.mxu0 0
        %1049 = vmatpush1.bf16.msra.mxu0 0
        %1050 = vmatprep.subr.bf16.mxu0 0
        %1051 = vmatpush1.bf16.msra.mxu0 0
        %1052 = vmatprep.subr.bf16.mxu0 0
        %1053 = vmatpush1.bf16.msra.mxu0 0
        %1054 = vmatprep.subr.bf16.mxu0 0
        %1055 = vmatpush1.bf16.msra.mxu0 0
        %1056 = vmatprep.subr.bf16.mxu0 0
        %1057 = vmatpush1.bf16.msra.mxu0 0
        %1058 = vmatprep.subr.bf16.mxu0 0
        %1059 = vmatpush1.bf16.msra.mxu0 0
        %1060 = vmatprep.subr.bf16.mxu0 0
        %1061 = vmatpush1.bf16.msra.mxu0 0
        %1062 = vmatprep.subr.bf16.mxu0 0
        %1063 = vmatpush1.bf16.msra.mxu0 0
        %1064 = vmatprep.subr.bf16.mxu0 0
        %1065 = vmatpush1.bf16.msra.mxu0 0
        %1066 = vmatprep.subr.bf16.mxu0 0
        %1067 = vmatpush1.bf16.msra.mxu0 0
        %1068 = vmatprep.subr.bf16.mxu0 0
        %1069 = vmatpush1.bf16.msra.mxu0 0
        %1070 = vmatprep.subr.bf16.mxu0 0
        %1071 = vmatpush1.bf16.msra.mxu0 0
        %1072 = vmatprep.mubr.bf16.mxu0 0
        %1073 = vmatmul.mubr.bf16.gmra.mrb[0].mxu0 %v876
        %v1074 = vpop.f32.mrb[0].mxu0
        %v1075 = vadd.f32 %v847, %v1074
        %v1076 = vpop.f32.mrb[0].mxu0
        %v1077 = vadd.f32 %v847, %v1076
        %v1078 = vpop.f32.mrb[0].mxu0
        %v1079 = vadd.f32 %v852, %v1078
        %v1080 = vpop.f32.mrb[0].mxu0
        %v1081 = vadd.f32 %v852, %v1080
        %1082 = vmatprep.mubr.bf16.mxu0 0
        %1083 = vmatmul.mubr.bf16.gmra.mrb[0].mxu0 %v879
        %v1084 = vpop.f32.mrb[0].mxu0
        %v1085 = vadd.f32 %v857, %v1084
        %v1086 = vpop.f32.mrb[0].mxu0
        %v1087 = vadd.f32 %v857, %v1086
        %v1088 = vpop.f32.mrb[0].mxu0
        %v1089 = vadd.f32 %v862, %v1088
        %v1090 = vpop.f32.mrb[0].mxu0
        %v1091 = vadd.f32 %v862, %v1090
        %1092 = vdwg.mxu0
        %1093 = vmatprep.subr.bf16.mxu0 %v785
        %1094 = vmatpush1.bf16.msra.mxu0 %v784
        %1095 = vmatprep.subr.bf16.mxu0 %v801
        %1096 = vmatpush1.bf16.msra.mxu0 %v800
        %1097 = vmatprep.subr.bf16.mxu0 %v817
        %1098 = vmatpush1.bf16.msra.mxu0 %v816
        %1099 = vmatprep.subr.bf16.mxu0 %v833
        %1100 = vmatpush1.bf16.msra.mxu0 %v832
        %1101 = vmatprep.subr.bf16.mxu0 0
        %1102 = vmatpush1.bf16.msra.mxu0 0
        %1103 = vmatprep.subr.bf16.mxu0 0
        %1104 = vmatpush1.bf16.msra.mxu0 0
        %1105 = vmatprep.subr.bf16.mxu0 0
        %1106 = vmatpush1.bf16.msra.mxu0 0
        %1107 = vmatprep.subr.bf16.mxu0 0
        %1108 = vmatpush1.bf16.msra.mxu0 0
        %1109 = vmatprep.subr.bf16.mxu0 0
        %1110 = vmatpush1.bf16.msra.mxu0 0
        %1111 = vmatprep.subr.bf16.mxu0 0
        %1112 = vmatpush1.bf16.msra.mxu0 0
        %1113 = vmatprep.subr.bf16.mxu0 0
        %1114 = vmatpush1.bf16.msra.mxu0 0
        %1115 = vmatprep.subr.bf16.mxu0 0
        %1116 = vmatpush1.bf16.msra.mxu0 0
        %1117 = vmatprep.subr.bf16.mxu0 0
        %1118 = vmatpush1.bf16.msra.mxu0 0
        %1119 = vmatprep.subr.bf16.mxu0 0
        %1120 = vmatpush1.bf16.msra.mxu0 0
        %1121 = vmatprep.subr.bf16.mxu0 0
        %1122 = vmatpush1.bf16.msra.mxu0 0
        %1123 = vmatprep.subr.bf16.mxu0 0
        %1124 = vmatpush1.bf16.msra.mxu0 0
        %1125 = vmatprep.mubr.bf16.mxu0 0
        %1126 = vmatmul.mubr.bf16.gmra.mrb[0].mxu0 %v876
        %v1127 = vpop.f32.mrb[0].mxu0
        %v1128 = vadd.f32 %v847, %v1127
        %v1129 = vpop.f32.mrb[0].mxu0
        %v1130 = vadd.f32 %v847, %v1129
        %v1131 = vpop.f32.mrb[0].mxu0
        %v1132 = vadd.f32 %v852, %v1131
        %v1133 = vpop.f32.mrb[0].mxu0
        %v1134 = vadd.f32 %v852, %v1133
        %1135 = vmatprep.mubr.bf16.mxu0 0
        %1136 = vmatmul.mubr.bf16.gmra.mrb[0].mxu0 %v879
        %v1137 = vpop.f32.mrb[0].mxu0
        %v1138 = vadd.f32 %v857, %v1137
        %v1139 = vpop.f32.mrb[0].mxu0
        %v1140 = vadd.f32 %v857, %v1139
        %v1141 = vpop.f32.mrb[0].mxu0
        %v1142 = vadd.f32 %v862, %v1141
        %v1143 = vpop.f32.mrb[0].mxu0
        %v1144 = vadd.f32 %v862, %v1143
        %1145 = vdwg.mxu0
        %1146 = vmatprep.subr.bf16.mxu0 %v787
        %1147 = vmatpush1.bf16.msra.mxu0 %v786
        %1148 = vmatprep.subr.bf16.mxu0 %v803
        %1149 = vmatpush1.bf16.msra.mxu0 %v802
        %1150 = vmatprep.subr.bf16.mxu0 %v819
        %1151 = vmatpush1.bf16.msra.mxu0 %v818
        %1152 = vmatprep.subr.bf16.mxu0 %v835
        %1153 = vmatpush1.bf16.msra.mxu0 %v834
        %1154 = vmatprep.subr.bf16.mxu0 0
        %1155 = vmatpush1.bf16.msra.mxu0 0
        %1156 = vmatprep.subr.bf16.mxu0 0
        %1157 = vmatpush1.bf16.msra.mxu0 0
        %1158 = vmatprep.subr.bf16.mxu0 0
        %1159 = vmatpush1.bf16.msra.mxu0 0
        %1160 = vmatprep.subr.bf16.mxu0 0
        %1161 = vmatpush1.bf16.msra.mxu0 0
        %1162 = vmatprep.subr.bf16.mxu0 0
        %1163 = vmatpush1.bf16.msra.mxu0 0
        %1164 = vmatprep.subr.bf16.mxu0 0
        %1165 = vmatpush1.bf16.msra.mxu0 0
        %1166 = vmatprep.subr.bf16.mxu0 0
        %1167 = vmatpush1.bf16.msra.mxu0 0
        %1168 = vmatprep.subr.bf16.mxu0 0
        %1169 = vmatpush1.bf16.msra.mxu0 0
        %1170 = vmatprep.subr.bf16.mxu0 0
        %1171 = vmatpush1.bf16.msra.mxu0 0
        %1172 = vmatprep.subr.bf16.mxu0 0
        %1173 = vmatpush1.bf16.msra.mxu0 0
        %1174 = vmatprep.subr.bf16.mxu0 0
        %1175 = vmatpush1.bf16.msra.mxu0 0
        %1176 = vmatprep.subr.bf16.mxu0 0
        %1177 = vmatpush1.bf16.msra.mxu0 0
        %1178 = vmatprep.mubr.bf16.mxu0 0
        %1179 = vmatmul.mubr.bf16.gmra.mrb[0].mxu0 %v876
        %v1180 = vpop.f32.mrb[0].mxu0
        %v1181 = vadd.f32 %v847, %v1180
        %v1182 = vpop.f32.mrb[0].mxu0
        %v1183 = vadd.f32 %v847, %v1182
        %v1184 = vpop.f32.mrb[0].mxu0
        %v1185 = vadd.f32 %v852, %v1184
        %v1186 = vpop.f32.mrb[0].mxu0
        %v1187 = vadd.f32 %v852, %v1186
        %1188 = vmatprep.mubr.bf16.mxu0 0
        %1189 = vmatmul.mubr.bf16.gmra.mrb[0].mxu0 %v879
        %v1190 = vpop.f32.mrb[0].mxu0
        %v1191 = vadd.f32 %v857, %v1190
        %v1192 = vpop.f32.mrb[0].mxu0
        %v1193 = vadd.f32 %v857, %v1192
        %v1194 = vpop.f32.mrb[0].mxu0
        %v1195 = vadd.f32 %v862, %v1194
        %v1196 = vpop.f32.mrb[0].mxu0
        %v1197 = vadd.f32 %v862, %v1196
        %1198 = vdwg.mxu0
        %1199 = vmatprep.subr.bf16.mxu0 %v789
        %1200 = vmatpush1.bf16.msra.mxu0 %v788
        %1201 = vmatprep.subr.bf16.mxu0 %v805
        %1202 = vmatpush1.bf16.msra.mxu0 %v804
        %1203 = vmatprep.subr.bf16.mxu0 %v821
        %1204 = vmatpush1.bf16.msra.mxu0 %v820
        %1205 = vmatprep.subr.bf16.mxu0 %v837
        %1206 = vmatpush1.bf16.msra.mxu0 %v836
        %1207 = vmatprep.subr.bf16.mxu0 0
        %1208 = vmatpush1.bf16.msra.mxu0 0
        %1209 = vmatprep.subr.bf16.mxu0 0
        %1210 = vmatpush1.bf16.msra.mxu0 0
        %1211 = vmatprep.subr.bf16.mxu0 0
        %1212 = vmatpush1.bf16.msra.mxu0 0
        %1213 = vmatprep.subr.bf16.mxu0 0
        %1214 = vmatpush1.bf16.msra.mxu0 0
        %1215 = vmatprep.subr.bf16.mxu0 0
        %1216 = vmatpush1.bf16.msra.mxu0 0
        %1217 = vmatprep.subr.bf16.mxu0 0
        %1218 = vmatpush1.bf16.msra.mxu0 0
        %1219 = vmatprep.subr.bf16.mxu0 0
        %1220 = vmatpush1.bf16.msra.mxu0 0
        %1221 = vmatprep.subr.bf16.mxu0 0
        %1222 = vmatpush1.bf16.msra.mxu0 0
        %1223 = vmatprep.subr.bf16.mxu0 0
        %1224 = vmatpush1.bf16.msra.mxu0 0
        %1225 = vmatprep.subr.bf16.mxu0 0
        %1226 = vmatpush1.bf16.msra.mxu0 0
        %1227 = vmatprep.subr.bf16.mxu0 0
        %1228 = vmatpush1.bf16.msra.mxu0 0
        %1229 = vmatprep.subr.bf16.mxu0 0
        %1230 = vmatpush1.bf16.msra.mxu0 0
        %1231 = vmatprep.mubr.bf16.mxu0 0
        %1232 = vmatmul.mubr.bf16.gmra.mrb[0].mxu0 %v876
        %v1233 = vpop.f32.mrb[0].mxu0
        %v1234 = vadd.f32 %v847, %v1233
        %v1235 = vpop.f32.mrb[0].mxu0
        %v1236 = vadd.f32 %v847, %v1235
        %v1237 = vpop.f32.mrb[0].mxu0
        %v1238 = vadd.f32 %v852, %v1237
        %v1239 = vpop.f32.mrb[0].mxu0
        %v1240 = vadd.f32 %v852, %v1239
        %1241 = vmatprep.mubr.bf16.mxu0 0
        %1242 = vmatmul.mubr.bf16.gmra.mrb[0].mxu0 %v879
        %v1243 = vpop.f32.mrb[0].mxu0
        %v1244 = vadd.f32 %v857, %v1243
        %v1245 = vpop.f32.mrb[0].mxu0
        %v1246 = vadd.f32 %v857, %v1245
        %v1247 = vpop.f32.mrb[0].mxu0
        %v1248 = vadd.f32 %v862, %v1247
        %v1249 = vpop.f32.mrb[0].mxu0
        %v1250 = vadd.f32 %v862, %v1249
        %1251 = vdwg.mxu0
        %1252 = vmatprep.subr.bf16.mxu0 %v791
        %1253 = vmatpush1.bf16.msra.mxu0 %v790
        %1254 = vmatprep.subr.bf16.mxu0 %v807
        %1255 = vmatpush1.bf16.msra.mxu0 %v806
        %1256 = vmatprep.subr.bf16.mxu0 %v823
        %1257 = vmatpush1.bf16.msra.mxu0 %v822
        %1258 = vmatprep.subr.bf16.mxu0 %v839
        %1259 = vmatpush1.bf16.msra.mxu0 %v838
        %1260 = vmatprep.subr.bf16.mxu0 0
        %1261 = vmatpush1.bf16.msra.mxu0 0
        %1262 = vmatprep.subr.bf16.mxu0 0
        %1263 = vmatpush1.bf16.msra.mxu0 0
        %1264 = vmatprep.subr.bf16.mxu0 0
        %1265 = vmatpush1.bf16.msra.mxu0 0
        %1266 = vmatprep.subr.bf16.mxu0 0
        %1267 = vmatpush1.bf16.msra.mxu0 0
        %1268 = vmatprep.subr.bf16.mxu0 0
        %1269 = vmatpush1.bf16.msra.mxu0 0
        %1270 = vmatprep.subr.bf16.mxu0 0
        %1271 = vmatpush1.bf16.msra.mxu0 0
        %1272 = vmatprep.subr.bf16.mxu0 0
        %1273 = vmatpush1.bf16.msra.mxu0 0
        %1274 = vmatprep.subr.bf16.mxu0 0
        %1275 = vmatpush1.bf16.msra.mxu0 0
        %1276 = vmatprep.subr.bf16.mxu0 0
        %1277 = vmatpush1.bf16.msra.mxu0 0
        %1278 = vmatprep.subr.bf16.mxu0 0
        %1279 = vmatpush1.bf16.msra.mxu0 0
        %1280 = vmatprep.subr.bf16.mxu0 0
        %1281 = vmatpush1.bf16.msra.mxu0 0
        %1282 = vmatprep.subr.bf16.mxu0 0
        %1283 = vmatpush1.bf16.msra.mxu0 0
        %1284 = vmatprep.mubr.bf16.mxu0 0
        %1285 = vmatmul.mubr.bf16.gmra.mrb[0].mxu0 %v876
        %v1286 = vpop.f32.mrb[0].mxu0
        %v1287 = vadd.f32 %v847, %v1286
        %v1288 = vpop.f32.mrb[0].mxu0
        %v1289 = vadd.f32 %v847, %v1288
        %v1290 = vpop.f32.mrb[0].mxu0
        %v1291 = vadd.f32 %v852, %v1290
        %v1292 = vpop.f32.mrb[0].mxu0
        %v1293 = vadd.f32 %v852, %v1292
        %1294 = vmatprep.mubr.bf16.mxu0 0
        %1295 = vmatmul.mubr.bf16.gmra.mrb[0].mxu0 %v879
        %v1296 = vpop.f32.mrb[0].mxu0
        %v1297 = vadd.f32 %v857, %v1296
        %v1298 = vpop.f32.mrb[0].mxu0
        %v1299 = vadd.f32 %v857, %v1298
        %v1300 = vpop.f32.mrb[0].mxu0
        %v1301 = vadd.f32 %v862, %v1300
        %v1302 = vpop.f32.mrb[0].mxu0
        %v1303 = vadd.f32 %v862, %v1302
        %1304 = vdwg.mxu0
        %1305 = vst [vmem:[%s206] sm:$0xff] %v916
        %1306 = vst [vmem:[%s206 + $0x8] sm:$0xff] %v918
        %1307 = vst [vmem:[%s206 + $0x10] sm:$0xff] %v969
        %1308 = vst [vmem:[%s206 + $0x18] sm:$0xff] %v971
        %1309 = vst [vmem:[%s206 + $0x20] sm:$0xff] %v1022
        %1310 = vst [vmem:[%s206 + $0x28] sm:$0xff] %v1024
        %1311 = vst [vmem:[%s206 + $0x30] sm:$0xff] %v1075
        %1312 = vst [vmem:[%s206 + $0x38] sm:$0xff] %v1077
        %1313 = vst [vmem:[%s206 + $0x40] sm:$0xff] %v1128
        %1314 = vst [vmem:[%s206 + $0x48] sm:$0xff] %v1130
        %1315 = vst [vmem:[%s206 + $0x50] sm:$0xff] %v1181
        %1316 = vst [vmem:[%s206 + $0x58] sm:$0xff] %v1183
        %1317 = vst [vmem:[%s206 + $0x60] sm:$0xff] %v1234
        %1318 = vst [vmem:[%s206 + $0x68] sm:$0xff] %v1236
        %1319 = vst [vmem:[%s206 + $0x70] sm:$0xff] %v1287
        %1320 = vst [vmem:[%s206 + $0x78] sm:$0xff] %v1289
        %1321 = vst [vmem:[%s206 + $0x80] sm:$0xff] %v920
        %1322 = vst [vmem:[%s206 + $0x88] sm:$0xff] %v922
        %1323 = vst [vmem:[%s206 + $0x90] sm:$0xff] %v973
        %1324 = vst [vmem:[%s206 + $0x98] sm:$0xff] %v975
        %1325 = vst [vmem:[%s206 + $0xa0] sm:$0xff] %v1026
        %1326 = vst [vmem:[%s206 + $0xa8] sm:$0xff] %v1028
        %1327 = vst [vmem:[%s206 + $0xb0] sm:$0xff] %v1079
        %1328 = vst [vmem:[%s206 + $0xb8] sm:$0xff] %v1081
        %1329 = vst [vmem:[%s206 + $0xc0] sm:$0xff] %v1132
        %1330 = vst [vmem:[%s206 + $0xc8] sm:$0xff] %v1134
        %1331 = vst [vmem:[%s206 + $0xd0] sm:$0xff] %v1185
        %1332 = vst [vmem:[%s206 + $0xd8] sm:$0xff] %v1187
        %1333 = vst [vmem:[%s206 + $0xe0] sm:$0xff] %v1238
        %1334 = vst [vmem:[%s206 + $0xe8] sm:$0xff] %v1240
        %1335 = vst [vmem:[%s206 + $0xf0] sm:$0xff] %v1291
        %1336 = vst [vmem:[%s206 + $0xf8] sm:$0xff] %v1293
        %1337 = vst [vmem:[%s206 + $0x100] sm:$0xff] %v926
        %1338 = vst [vmem:[%s206 + $0x108] sm:$0xff] %v928
        %1339 = vst [vmem:[%s206 + $0x110] sm:$0xff] %v979
        %1340 = vst [vmem:[%s206 + $0x118] sm:$0xff] %v981
        %1341 = vst [vmem:[%s206 + $0x120] sm:$0xff] %v1032
        %1342 = vst [vmem:[%s206 + $0x128] sm:$0xff] %v1034
        %1343 = vst [vmem:[%s206 + $0x130] sm:$0xff] %v1085
        %1344 = vst [vmem:[%s206 + $0x138] sm:$0xff] %v1087
        %1345 = vst [vmem:[%s206 + $0x140] sm:$0xff] %v1138
        %1346 = vst [vmem:[%s206 + $0x148] sm:$0xff] %v1140
        %1347 = vst [vmem:[%s206 + $0x150] sm:$0xff] %v1191
        %1348 = vst [vmem:[%s206 + $0x158] sm:$0xff] %v1193
        %1349 = vst [vmem:[%s206 + $0x160] sm:$0xff] %v1244
        %1350 = vst [vmem:[%s206 + $0x168] sm:$0xff] %v1246
        %1351 = vst [vmem:[%s206 + $0x170] sm:$0xff] %v1297
        %1352 = vst [vmem:[%s206 + $0x178] sm:$0xff] %v1299
        %1353 = vst [vmem:[%s206 + $0x180] sm:$0xff] %v930
        %1354 = vst [vmem:[%s206 + $0x188] sm:$0xff] %v932
        %1355 = vst [vmem:[%s206 + $0x190] sm:$0xff] %v983
        %1356 = vst [vmem:[%s206 + $0x198] sm:$0xff] %v985
        %1357 = vst [vmem:[%s206 + $0x1a0] sm:$0xff] %v1036
        %1358 = vst [vmem:[%s206 + $0x1a8] sm:$0xff] %v1038
        %1359 = vst [vmem:[%s206 + $0x1b0] sm:$0xff] %v1089
        %1360 = vst [vmem:[%s206 + $0x1b8] sm:$0xff] %v1091
        %1361 = vst [vmem:[%s206 + $0x1c0] sm:$0xff] %v1142
        %1362 = vst [vmem:[%s206 + $0x1c8] sm:$0xff] %v1144
        %1363 = vst [vmem:[%s206 + $0x1d0] sm:$0xff] %v1195
        %1364 = vst [vmem:[%s206 + $0x1d8] sm:$0xff] %v1197
        %1365 = vst [vmem:[%s206 + $0x1e0] sm:$0xff] %v1248
        %1366 = vst [vmem:[%s206 + $0x1e8] sm:$0xff] %v1250
        %1367 = vst [vmem:[%s206 + $0x1f0] sm:$0xff] %v1301
        %1368 = vst [vmem:[%s206 + $0x1f8] sm:$0xff] %v1303
        %s1369 = sand.u32 %s112, 1
        %s1370 = scalar_lea.sflag [#allocation5], %s1369
        %s1371 = sand.u32 %s112, 1
        %s1372 = smul.addr %s1371, 512
        %s1373 = scalar_lea.vmem [#allocation6], %s1372
        // Predicated region
        $region37: #{tpu_custom_call.1} parent=31 // pred_check
          %p1374 = pneg %p122
        $region38: #{tpu_custom_call.1} parent=31 // pred_check_branch
          %1376 = sbr.rel (%p1374) target = $region40
        $region39: #{tpu_custom_call.1} parent=31 // pred_region
          %s1377 = smul.u32 16, %s25
          %s1379 = ssub.s32 8192, 8192
          %1380 = vsyncadd %s1370, %s1379
          %s1381 = smul.addr %s24, 128
          %s1382 = sadd.s32 %s1377, %s1381
          %s1383 = smul.addr %s1382, 128
          %s1384 = scalar_lea.hbm %s3, %s1383
          %s1385 = sshll.u32 %s1373, 4
          %s1386 = int_to_ptr.vmem [resolvable:$true] %s1385
          %1391 = dma.vmem_to_hbm [thread:$0]  %s1386, 8192, %s1384, %s1370, 2048, 4096, 128
        $region40: #{tpu_custom_call.1} parent=31 // pred_fallthru
          _
      $region32: #{tpu_custom_call.1} parent=5 // pred_fallthru
        _
      %p1392 = scmp.le.s32.totalorder 2, %s15
      // Predicated region
      $region41: #{tpu_custom_call.1} parent=5 // pred_check
        %p1393 = pneg %p1392
      $region42: #{tpu_custom_call.1} parent=5 // pred_check_branch
        %1395 = sbr.rel (%p1393) target = $region44
      $region43: #{tpu_custom_call.1} parent=5 // pred_region
        %s1396 = ssub.s32 %s15, 2
        // Predicated region
        $region45: #{tpu_custom_call.1} parent=43 // pred_check
          %p1397 = pneg %p128
        $region46: #{tpu_custom_call.1} parent=43 // pred_check_branch
          %1399 = sbr.rel (%p1397) target = $region48
        $region47: #{tpu_custom_call.1} parent=43 // pred_region
          %s1400 = sand.u32 %s113, 1
          %s1401 = scalar_lea.sflag [#allocation5], %s1400
          %s1402 = sand.u32 %s113, 1
          %s1403 = smul.addr %s1402, 512
          %s1404 = scalar_lea.vmem [#allocation6], %s1403
          %1405 = dma.done %s1401, 8192
        $region48: #{tpu_custom_call.1} parent=43 // pred_fallthru
          _
      $region44: #{tpu_custom_call.1} parent=5 // pred_fallthru
        _
    $region6: #{tpu_custom_call.1} parent=1 // loop_footer
      %s19 = sadd.s32 1, %s15
    $region7: #{tpu_custom_call.1} parent=1 // loop_footer_branch
      %14 = sbr.rel target = $region3
    $region8: #{tpu_custom_call.1} parent=1 // loop_exit
      _
    %1406 = vsyncpa [#allocation4], 1
    %s1407 = scalar_lea.sflag [#allocation4], 1
    %1408 = vsyncpa %s1407, 1
    %1409 = vsyncpa [#allocation5], 1
    %s1410 = scalar_lea.sflag [#allocation5], 1
    %1411 = vsyncpa %s1410, 1

</llo_original>
